<compile_context>
chip_gen: v5e
topology: v5e:2x2
jax: 0.10.0
libtpu: 0.0.40
codegen_flags: <defaults>
</compile_context>

<pallas_src>
import numpy as np
import jax
import jax.numpy as jnp
from jax import lax
from jax.experimental import pallas as pl
from jax.experimental.pallas import tpu as pltpu

NEG_INF = -1e30
LEAKY_SLOPE = 0.2   # GATConv default negative_slope


# ------------------------------ device params --------------------------------
def _device_params():
    """Generation-aware VMEM budget/cap and bf16-EUP availability."""
    kind = ""
    try:
        kind = jax.devices()[0].device_kind.lower()
    except Exception:
        pass
    if "v7" in kind:
        # 64 MiB VMEM/TC: never request the full 64 MiB (Mosaic scratch headroom).
        return {"vmem_budget": 44 << 20, "vmem_cap": 56 << 20, "bf16_eup": True}
    if "v6" in kind:
        # 128 MiB physical, scoped default is only 32 MiB -> raise it.
        return {"vmem_budget": 96 << 20, "vmem_cap": 110 << 20, "bf16_eup": True}
    # v5e / v5p / v4: 128 MiB physical VMEM, but no bf16 VPU/EUP -> f32 exp.
    return {"vmem_budget": 96 << 20, "vmem_cap": 110 << 20, "bf16_eup": False}


# ------------------------- kernel 1: fused projection ------------------------
def _proj_kernel(x_ref, w_ref, asrc_ref, adst_ref, xw_ref, a_src_ref, a_dst_ref):
    # Head-fused projection [TM,Fin] @ [Fin,H*Fout].  Explicit HIGHEST
    # precision: kernel 1 is a tiny fraction of total time (fidelity > speed).
    xw = jnp.dot(x_ref[...], w_ref[...],
                 precision=lax.Precision.HIGHEST,
                 preferred_element_type=jnp.float32)            # [TM, HF] f32
    xw_ref[...] = xw.astype(xw_ref.dtype)                       # bf16 stream for kernel 2
    # Per-node attention scalars straight off the MXU in lane-dense [H, TM]
    # form (contract the feature axis of both operands -> no XLU transpose,
    # no 4-lane-wide masked stores).
    a_src_ref[...] = lax.dot_general(
        asrc_ref[...], xw, (((1,), (1,)), ((), ())),
        precision=lax.Precision.HIGHEST, preferred_element_type=jnp.float32)
    a_dst_ref[...] = lax.dot_general(
        adst_ref[...], xw, (((1,), (1,)), ((), ())),
        precision=lax.Precision.HIGHEST, preferred_element_type=jnp.float32)


# ----------------- kernel 2: dst-tiled softmax attention + ELU ----------------
def _make_attn_kernel(num_heads, f_out, use_bf16_exp):
    hf = num_heads * f_out

    def attn_kernel(xw_ref, a_src_ref, a_dst_ref, ea_ref, bias_ref, out_ref,
                    acc_ref):
        # ---- all heads fused: masked logits -> LeakyReLU -> softmax --------
        # ea block is bf16 [H, T, N] with the adjacency mask pre-folded
        # (-1e30 at non-edges); math in f32.  Every dst row has a self-loop
        # (add_self_loops=True) so the row max is always finite.
        e = ea_ref[...].astype(jnp.float32)                       # [H, T, N]
        e = e + a_src_ref[...][:, None, :] + a_dst_ref[...][:, :, None]
        e = jnp.where(e > 0.0, e, LEAKY_SLOPE * e)                # LeakyReLU(0.2)
        z = e - jnp.max(e, axis=-1, keepdims=True)                # [H, T, N]
        if use_bf16_exp:
            # v6e/v7x: bf16 EUP ~2x f32 throughput; row-sum stays f32.
            p = jnp.exp(z.astype(jnp.bfloat16))                   # [H, T, N] bf16
            s = jnp.sum(p.astype(jnp.float32), axis=-1, keepdims=True)
        else:
            # v5e has no bf16 VPU/EUP -> f32 exp; bf16 only for the MXU operand.
            p32 = jnp.exp(z)
            s = jnp.sum(p32, axis=-1, keepdims=True)
            p = p32.astype(jnp.bfloat16)
        inv = pl.reciprocal(s)                                    # [H, T, 1]

        # ---- per-head bf16 MXU aggregation into a [T, HF] f32 accumulator --
        # NOTE: xw stays [N, H*Fout]; a head-major [H, N, Fout] layout would
        # lane-pad Fout(16)->128 in VMEM (8x), so accept the small per-head
        # column-slice copies instead.
        xw = xw_ref[...]                                          # [N, HF] bf16
        for h in range(num_heads):                                # static, small H
            lo, hi = h * f_out, (h + 1) * f_out
            o_h = jnp.dot(p[h], xw[:, lo:hi],                     # bf16 x bf16
                          preferred_element_type=jnp.float32)     # [T, Fout] f32
            acc_ref[:, lo:hi] = o_h * inv[h]                      # normalize after dot

        # ---- bias + ELU once on the full block, single lane-dense store ----
        out = acc_ref[...] + bias_ref[...]
        out_ref[...] = jnp.where(
            out > 0.0, out, jnp.exp(jnp.minimum(out, 0.0)) - 1.0
        ).astype(out_ref.dtype)

    return attn_kernel


# ------------------------------- tile pickers ---------------------------------
def _pick_row_tile(n, pref=512):
    """Kernel-1 row tile: the lane-dense a_src/a_dst output blocks are [H, TM],
    so TM must be a multiple of 128 (or the full N)."""
    if n <= pref or n % 128 != 0:
        return n
    t = pref - (pref % 128)
    while n % t != 0:
        t -= 128
    return max(t, 128)


def _pick_dst_tile(n_dst, *, h, f_out, n_src, vmem_budget, requested=None):
    """Kernel-2 destination tile (multiple of 32, divides N), derived from the
    per-generation VMEM budget rather than a fixed heuristic."""
    hf = h * f_out
    if requested is not None:
        assert n_dst % requested == 0
        assert requested == n_dst or requested % 32 == 0
        return requested
    # Resident single-buffered constant blocks.
    resident = n_src * hf * 2 + h * n_src * 4 + hf * 4
    # Per-dst-row cost: bf16 logits (x2 DMA buffers) + ~3 f32 working copies of
    # the fused [H, T, N] elementwise intermediates + out/acc f32 blocks.
    per_row = h * n_src * (2 * 2 + 12) + hf * 4 * 3
    avail = vmem_budget - resident - (4 << 20)
    cap = max(32, avail // per_row)
    if n_dst <= cap or n_dst % 32 != 0:
        # TODO(synk): very large / non-32-divisible N needs the block-sparse path.
        return n_dst
    t = min((cap // 32) * 32, n_dst)
    while t >= 32 and n_dst % t != 0:
        t -= 32
    return t if t >= 32 else n_dst


# --------------------------------- wrapper ------------------------------------
def _gat_forward(x, w_flat, att_src, att_dst, bias, edge_alpha_dense, *,
                 tile_dst, single_buffer_constants):
    N, Fin = x.shape
    H, Fout = att_src.shape
    HF = H * Fout
    assert w_flat.shape == (Fin, HF)
    assert edge_alpha_dense.shape == (H, N, N)

    dev = _device_params()

    def const_spec(shape, index_map):
        # Constant-index blocks: single-buffer to reclaim VMEM (feedback P5).
        if single_buffer_constants:
            return pl.BlockSpec(shape, index_map, pipeline_mode=pl.Buffered(1))
        return pl.BlockSpec(shape, index_map)

    # Block-diagonal expansion so each per-head <xw_h, att_h> is one MXU dot.
    eye = jnp.eye(H, dtype=jnp.float32)
    att_src_m = (eye[:, :, None] * att_src[None].astype(jnp.float32)).reshape(H, HF)
    att_dst_m = (eye[:, :, None] * att_dst[None].astype(jnp.float32)).reshape(H, HF)

    # ---- kernel 1: row-tiled head-fused projection + attention scalars -----
    row_tile = _pick_row_tile(N)
    xw, a_src, a_dst = pl.pallas_call(
        _proj_kernel,
        out_shape=(jax.ShapeDtypeStruct((N, HF), jnp.bfloat16),
                   jax.ShapeDtypeStruct((H, N), jnp.float32),
                   jax.ShapeDtypeStruct((H, N), jnp.float32)),
        grid_spec=pltpu.PrefetchScalarGridSpec(
            num_scalar_prefetch=0,
            grid=(N // row_tile,),
            in_specs=[
                pl.BlockSpec((row_tile, Fin), lambda i: (i, 0)),   # x rows
                const_spec((Fin, HF), lambda i: (0, 0)),           # W (constant)
                const_spec((H, HF), lambda i: (0, 0)),             # att_src (constant)
                const_spec((H, HF), lambda i: (0, 0)),             # att_dst (constant)
            ],
            out_specs=[pl.BlockSpec((row_tile, HF), lambda i: (i, 0)),
                       pl.BlockSpec((H, row_tile), lambda i: (0, i)),
                       pl.BlockSpec((H, row_tile), lambda i: (0, i))],
        ),
        compiler_params=pltpu.CompilerParams(
            dimension_semantics=("parallel",)),
    )(x.astype(jnp.float32), w_flat.astype(jnp.float32), att_src_m, att_dst_m)

    # ---- kernel 2: masked softmax attention + aggregation, dst-tiled -------
    tile = _pick_dst_tile(N, h=H, f_out=Fout, n_src=N,
                          vmem_budget=dev["vmem_budget"], requested=tile_dst)
    n_tiles = N // tile
    bias2d = bias.reshape(1, HF).astype(jnp.float32)
    ea = edge_alpha_dense.astype(jnp.bfloat16)   # bf16 O(H*N^2) HBM stream
    # Pre-tile a_dst so kernel 2 gets a lane-dense [H, tile] block per step
    # via a squeezed leading grid dim (no in-kernel dynamic lane slicing).
    a_dst_t = a_dst.reshape(H, n_tiles, tile).transpose(1, 0, 2)  # [nT, H, tile]

    # Explicit scoped-VMEM request: resident constants + double-buffered ea
    # tile + f32 working copies + out/acc blocks, clamped to a per-gen cap.
    nbuf_const = 1 if single_buffer_constants else 2
    resident = nbuf_const * (N * HF * 2 + H * N * 4 + HF * 4)
    per_step = (H * tile * N * (2 * 2 + 12)        # ea buffers + f32 intermediates
                + tile * HF * 4 * 3                # out (x2) + acc scratch
                + H * tile * 4 * 2)                # a_dst tile (double-buffered)
    vmem_limit = int(max(32 << 20,
                         min(resident + per_step + (8 << 20), dev["vmem_cap"])))

    out = pl.pallas_call(
        _make_attn_kernel(H, Fout, dev["bf16_eup"]),
        out_shape=jax.ShapeDtypeStruct((N, HF), jnp.float32),
        grid_spec=pltpu.PrefetchScalarGridSpec(
            num_scalar_prefetch=0,
            grid=(n_tiles,),
            in_specs=[
                const_spec((N, HF), lambda t: (0, 0)),             # xw (bf16, all src)
                const_spec((H, N), lambda t: (0, 0)),              # a_src (constant)
                pl.BlockSpec((None, H, tile), lambda t: (t, 0, 0)),  # a_dst tile
                pl.BlockSpec((H, tile, N), lambda t: (0, t, 0)),   # bf16 logits tile
                const_spec((1, HF), lambda t: (0, 0)),             # bias (constant)
            ],
            out_specs=pl.BlockSpec((tile, HF), lambda t: (t, 0)),
            scratch_shapes=[pltpu.VMEM((tile, HF), jnp.float32)],
        ),
        compiler_params=pltpu.CompilerParams(
            dimension_semantics=("parallel",),
            vmem_limit_bytes=vmem_limit),
    )(xw, a_src, a_dst_t, ea, bias2d)
    return out


def gat_layer_forward(x, w_flat, att_src, att_dst, bias, edge_alpha_dense,
                      *, tile_dst=None):
    """x:[N,Fin]  w_flat:[Fin,H*Fout]  att_src/att_dst:[H,Fout]  bias:[H*Fout]
       edge_alpha_dense:[H,N,N]  layout (head, dst, src), adjacency mask
       pre-folded (non-edges = -1e30).  Returns [N, H*Fout] (PyG concat=True)."""
    try:
        return _gat_forward(x, w_flat, att_src, att_dst, bias, edge_alpha_dense,
                            tile_dst=tile_dst, single_buffer_constants=True)
    except Exception:
        # TODO(synk): pl.Buffered(1) single-buffering unsupported on this jax
        # build -> fall back to default double-buffered constant blocks.
        return _gat_forward(x, w_flat, att_src, att_dst, bias, edge_alpha_dense,
                            tile_dst=tile_dst, single_buffer_constants=False)


# ---------------------- pure-numpy reference (edge-list) ----------------------
def ref_gat(x, W_flat, att_src, att_dst, a_e, bias, src, dst, N, H, Fout):
    xw = (x @ W_flat).reshape(N, H, Fout)
    a_src = (xw * att_src).sum(-1)                    # [N, H]
    a_dst = (xw * att_dst).sum(-1)                    # [N, H]
    E = src.shape[0]
    alpha = np.zeros((E, H), np.float64)
    for e in range(E):
        alpha[e] = a_src[src[e]] + a_dst[dst[e]] + a_e[e]
    alpha = np.where(alpha > 0, alpha, LEAKY_SLOPE * alpha)
    out = np.zeros((N, H, Fout), np.float64)
    for i in range(N):
        idx = np.where(dst == i)[0]
        for h in range(H):
            a = alpha[idx, h]
            a = np.exp(a - a.max())
            a = a / a.sum()
            out[i, h] = (a[:, None] * xw[src[idx], h]).sum(0)
    out = out.reshape(N, H * Fout) + bias
    return np.where(out > 0, out, np.exp(out) - 1.0)


if __name__ == "__main__":
    N, Fin, Fout, H = 64, 16, 16, 4
    TILE_DST = 32   # two dst tiles -> exercises the parallel grid axis

    key = jax.random.PRNGKey(0)
    k_x, k_w, k_as, k_ad, k_ae, k_le, k_b, k_edge = jax.random.split(key, 8)
    x = jax.random.normal(k_x, (N, Fin), jnp.float32)
    W_flat = jax.random.normal(k_w, (Fin, H * Fout), jnp.float32) * 0.2
    att_src = jax.random.normal(k_as, (1, H, Fout), jnp.float32) * 0.2
    att_dst = jax.random.normal(k_ad, (1, H, Fout), jnp.float32) * 0.2
    att_edge = jax.random.normal(k_ae, (1, H, Fout), jnp.float32) * 0.2
    lin_edge_w = jax.random.normal(k_le, (1, H * Fout), jnp.float32) * 0.2
    bias = jax.random.normal(k_b, (H * Fout,), jnp.float32) * 0.1

    # Deterministic sparse edge structure (no self loops, no duplicates).
    src_l, dst_l = [], []
    for i in range(N):
        for j in range(N):
            if i != j and (3 * i + 7 * j) % 5 == 0:
                src_l.append(j)   # source
                dst_l.append(i)   # target (message j -> i)
    src0 = np.asarray(src_l, np.int32)
    dst0 = np.asarray(dst_l, np.int32)
    E0 = src0.shape[0]
    edge_attr0 = np.asarray(jax.random.normal(k_edge, (E0, 1), jnp.float32))

    # GATConv default add_self_loops=True, fill_value='mean':
    # self-loop edge_attr = mean of incoming edge attrs per destination node.
    loop_attr = np.zeros((N, 1), np.float32)
    cnt = np.zeros(N, np.float32)
    for e in range(E0):
        loop_attr[dst0[e]] += edge_attr0[e]
        cnt[dst0[e]] += 1.0
    loop_attr = loop_attr / np.maximum(cnt, 1.0)[:, None]
    src = np.concatenate([src0, np.arange(N, dtype=np.int32)])
    dst = np.concatenate([dst0, np.arange(N, dtype=np.int32)])
    edge_attr = np.concatenate([edge_attr0, loop_attr], axis=0)
    E = src.shape[0]

    # Glue: edge-feature attention term (tiny [E,1]@[1,H*Fout]) -> densify with
    # the adjacency mask folded in (-1e30 at non-edges); stored as bf16 in HBM.
    # TODO(synk): edge-dropout on attention coeffs is training-only (identity in eval).
    ef = (edge_attr @ np.asarray(lin_edge_w)).reshape(E, H, Fout)
    a_e = (ef * np.asarray(att_edge)).sum(-1)                    # [E, H]
    a_e = np.asarray(jnp.asarray(a_e, jnp.float32)
                     .astype(jnp.bfloat16).astype(jnp.float32))  # bf16 storage
    edge_alpha_dense = np.full((H, N, N), NEG_INF, np.float32)
    for e in range(E):
        edge_alpha_dense[:, dst[e], src[e]] = a_e[e]

    out = gat_layer_forward(
        x, jnp.asarray(W_flat),
        jnp.asarray(att_src).reshape(H, Fout),
        jnp.asarray(att_dst).reshape(H, Fout),
        jnp.asarray(bias),
        jnp.asarray(edge_alpha_dense),
        tile_dst=TILE_DST)
    out = jax.block_until_ready(out)
    # batchnorm=Identity, residual=False, nn.Dropout eval-mode -> identity.

    ref = ref_gat(np.asarray(x), np.asarray(W_flat), np.asarray(att_src),
                  np.asarray(att_dst), a_e, np.asarray(bias),
                  src, dst, N, H, Fout)
    # Tolerance reflects the deliberate bf16 pipeline (bf16 xw storage, bf16
    # softmax probabilities / bf16 EUP exp on v6e+, bf16 MXU aggregation).
    np.testing.assert_allclose(np.asarray(out), ref, rtol=3e-2, atol=3e-2)
    print("KERNEL_OK")
</pallas_src>

<mosaic_0001>
module attributes {stable_mosaic.version = 11 : i64} {
  func.func @_proj_kernel(%arg0: i32, %arg1: memref<64x16xf32, #tpu.memory_space<vmem>>, %arg2: memref<16x64xf32, #tpu.memory_space<vmem>>, %arg3: memref<4x64xf32, #tpu.memory_space<vmem>>, %arg4: memref<4x64xf32, #tpu.memory_space<vmem>>, %arg5: memref<64x64xbf16, #tpu.memory_space<vmem>>, %arg6: memref<4x64xf32, #tpu.memory_space<vmem>>, %arg7: memref<4x64xf32, #tpu.memory_space<vmem>>) attributes {dimension_semantics = [#tpu.dimension_semantics<parallel>], iteration_bounds = array<i64: 1>, scalar_prefetch = 0 : i64, scratch_operands = 0 : i64, tpu.core_type = #tpu.core_type<tc>, window_params = [{transform_indices = @transform_0, window_bounds = array<i64: 64, 16>}, {pipeline_mode = #tpu.pipeline_mode<synchronous>, transform_indices = @transform_1, window_bounds = array<i64: 16, 64>}, {pipeline_mode = #tpu.pipeline_mode<synchronous>, transform_indices = @transform_2, window_bounds = array<i64: 4, 64>}, {pipeline_mode = #tpu.pipeline_mode<synchronous>, transform_indices = @transform_3, window_bounds = array<i64: 4, 64>}, {transform_indices = @transform_4, window_bounds = array<i64: 64, 64>}, {transform_indices = @transform_5, window_bounds = array<i64: 4, 64>}, {transform_indices = @transform_6, window_bounds = array<i64: 4, 64>}]} {
    %c0 = arith.constant 0 : index
    %c0_0 = arith.constant 0 : index
    %0 = vector.load %arg1[%c0, %c0_0] : memref<64x16xf32, #tpu.memory_space<vmem>>, vector<64x16xf32>
    %c0_1 = arith.constant 0 : index
    %c0_2 = arith.constant 0 : index
    %1 = vector.load %arg2[%c0_1, %c0_2] : memref<16x64xf32, #tpu.memory_space<vmem>>, vector<16x64xf32>
    %cst = arith.constant dense<0.000000e+00> : vector<64x64xf32>
    %2 = tpu.matmul %0, %1, %cst {dimension_numbers = #tpu.dot_dimension_numbers<[1], [0], [0], [1], [0, 0, 1, 1], [], []>, precision = #tpu.contract_precision<fp32>} : vector<64x16xf32>, vector<16x64xf32>, vector<64x64xf32> -> vector<64x64xf32>
    %3 = arith.truncf %2 : vector<64x64xf32> to vector<64x64xbf16>
    %c0_3 = arith.constant 0 : index
    %c0_4 = arith.constant 0 : index
    %4 = vector.load %arg5[%c0_3, %c0_4] : memref<64x64xbf16, #tpu.memory_space<vmem>>, vector<64x64xbf16>
    tpu.vector_store %arg5[%c0_3, %c0_4], %3 {strides = array<i32>} : memref<64x64xbf16, #tpu.memory_space<vmem>>, vector<64x64xbf16>,
    %c0_5 = arith.constant 0 : index
    %c0_6 = arith.constant 0 : index
    %5 = vector.load %arg3[%c0_5, %c0_6] : memref<4x64xf32, #tpu.memory_space<vmem>>, vector<4x64xf32>
    %cst_7 = arith.constant dense<0.000000e+00> : vector<4x64xf32>
    %6 = tpu.matmul %5, %2, %cst_7 {dimension_numbers = #tpu.dot_dimension_numbers<[1], [1], [0], [0], [0, 0, 1, 0], [], []>, precision = #tpu.contract_precision<fp32>} : vector<4x64xf32>, vector<64x64xf32>, vector<4x64xf32> -> vector<4x64xf32>
    %c0_8 = arith.constant 0 : index
    %c0_9 = arith.constant 0 : index
    %7 = vector.load %arg6[%c0_8, %c0_9] : memref<4x64xf32, #tpu.memory_space<vmem>>, vector<4x64xf32>
    tpu.vector_store %arg6[%c0_8, %c0_9], %6 {strides = array<i32>} : memref<4x64xf32, #tpu.memory_space<vmem>>, vector<4x64xf32>,
    %c0_10 = arith.constant 0 : index
    %c0_11 = arith.constant 0 : index
    %8 = vector.load %arg4[%c0_10, %c0_11] : memref<4x64xf32, #tpu.memory_space<vmem>>, vector<4x64xf32>
    %cst_12 = arith.constant dense<0.000000e+00> : vector<4x64xf32>
    %9 = tpu.matmul %8, %2, %cst_12 {dimension_numbers = #tpu.dot_dimension_numbers<[1], [1], [0], [0], [0, 0, 1, 0], [], []>, precision = #tpu.contract_precision<fp32>} : vector<4x64xf32>, vector<64x64xf32>, vector<4x64xf32> -> vector<4x64xf32>
    %c0_13 = arith.constant 0 : index
    %c0_14 = arith.constant 0 : index
    %10 = vector.load %arg7[%c0_13, %c0_14] : memref<4x64xf32, #tpu.memory_space<vmem>>, vector<4x64xf32>
    tpu.vector_store %arg7[%c0_13, %c0_14], %9 {strides = array<i32>} : memref<4x64xf32, #tpu.memory_space<vmem>>, vector<4x64xf32>,
    return
  }
  func.func @transform_0(%arg0: i32) -> (i32, i32) {
    %c0_i32 = arith.constant 0 : i32
    %c0_i32_0 = arith.constant 0 : i32
    return %arg0, %c0_i32 : i32, i32
  }
  func.func @transform_1(%arg0: i32) -> (i32, i32) {
    %c0_i32 = arith.constant 0 : i32
    %c0_i32_0 = arith.constant 0 : i32
    %c0_i32_1 = arith.constant 0 : i32
    return %c0_i32, %c0_i32_0 : i32, i32
  }
  func.func @transform_2(%arg0: i32) -> (i32, i32) {
    %c0_i32 = arith.constant 0 : i32
    %c0_i32_0 = arith.constant 0 : i32
    %c0_i32_1 = arith.constant 0 : i32
    return %c0_i32, %c0_i32_0 : i32, i32
  }
  func.func @transform_3(%arg0: i32) -> (i32, i32) {
    %c0_i32 = arith.constant 0 : i32
    %c0_i32_0 = arith.constant 0 : i32
    %c0_i32_1 = arith.constant 0 : i32
    return %c0_i32, %c0_i32_0 : i32, i32
  }
  func.func @transform_4(%arg0: i32) -> (i32, i32) {
    %c0_i32 = arith.constant 0 : i32
    %c0_i32_0 = arith.constant 0 : i32
    return %arg0, %c0_i32 : i32, i32
  }
  func.func @transform_5(%arg0: i32) -> (i32, i32) {
    %c0_i32 = arith.constant 0 : i32
    %c0_i32_0 = arith.constant 0 : i32
    return %c0_i32, %arg0 : i32, i32
  }
  func.func @transform_6(%arg0: i32) -> (i32, i32) {
    %c0_i32 = arith.constant 0 : i32
    %c0_i32_0 = arith.constant 0 : i32
    return %c0_i32, %arg0 : i32, i32
  }
}

module attributes {stable_mosaic.version = 11 : i64} {
  func.func @_proj_kernel(%arg0: i32, %arg1: memref<64x16xf32, #tpu.memory_space<vmem>>, %arg2: memref<16x64xf32, #tpu.memory_space<vmem>>, %arg3: memref<4x64xf32, #tpu.memory_space<vmem>>, %arg4: memref<4x64xf32, #tpu.memory_space<vmem>>, %arg5: memref<64x64xbf16, #tpu.memory_space<vmem>>, %arg6: memref<4x64xf32, #tpu.memory_space<vmem>>, %arg7: memref<4x64xf32, #tpu.memory_space<vmem>>) attributes {dimension_semantics = [#tpu.dimension_semantics<parallel>], iteration_bounds = array<i64: 1>, scalar_prefetch = 0 : i64, scratch_operands = 0 : i64, tpu.core_type = #tpu.core_type<tc>, window_params = [{transform_indices = @transform_0, window_bounds = array<i64: 64, 16>}, {pipeline_mode = #tpu.pipeline_mode<synchronous>, transform_indices = @transform_1, window_bounds = array<i64: 16, 64>}, {pipeline_mode = #tpu.pipeline_mode<synchronous>, transform_indices = @transform_2, window_bounds = array<i64: 4, 64>}, {pipeline_mode = #tpu.pipeline_mode<synchronous>, transform_indices = @transform_3, window_bounds = array<i64: 4, 64>}, {transform_indices = @transform_4, window_bounds = array<i64: 64, 64>}, {transform_indices = @transform_5, window_bounds = array<i64: 4, 64>}, {transform_indices = @transform_6, window_bounds = array<i64: 4, 64>}]} {
    %c0 = arith.constant 0 : index
    %c0_0 = arith.constant 0 : index
    %0 = vector.load %arg1[%c0, %c0_0] : memref<64x16xf32, #tpu.memory_space<vmem>>, vector<64x16xf32>
    %c0_1 = arith.constant 0 : index
    %c0_2 = arith.constant 0 : index
    %1 = vector.load %arg2[%c0_1, %c0_2] : memref<16x64xf32, #tpu.memory_space<vmem>>, vector<16x64xf32>
    %cst = arith.constant dense<0.000000e+00> : vector<64x64xf32>
    %2 = tpu.matmul %0, %1, %cst {dimension_numbers = #tpu.dot_dimension_numbers<[1], [0], [0], [1], [0, 0, 1, 1], [], []>, precision = #tpu.contract_precision<fp32>} : vector<64x16xf32>, vector<16x64xf32>, vector<64x64xf32> -> vector<64x64xf32>
    %3 = arith.truncf %2 : vector<64x64xf32> to vector<64x64xbf16>
    %c0_3 = arith.constant 0 : index
    %c0_4 = arith.constant 0 : index
    %4 = vector.load %arg5[%c0_3, %c0_4] : memref<64x64xbf16, #tpu.memory_space<vmem>>, vector<64x64xbf16>
    tpu.vector_store %arg5[%c0_3, %c0_4], %3 {strides = array<i32>} : memref<64x64xbf16, #tpu.memory_space<vmem>>, vector<64x64xbf16>,
    %c0_5 = arith.constant 0 : index
    %c0_6 = arith.constant 0 : index
    %5 = vector.load %arg3[%c0_5, %c0_6] : memref<4x64xf32, #tpu.memory_space<vmem>>, vector<4x64xf32>
    %cst_7 = arith.constant dense<0.000000e+00> : vector<4x64xf32>
    %6 = tpu.matmul %5, %2, %cst_7 {dimension_numbers = #tpu.dot_dimension_numbers<[1], [1], [0], [0], [0, 0, 1, 0], [], []>, precision = #tpu.contract_precision<fp32>} : vector<4x64xf32>, vector<64x64xf32>, vector<4x64xf32> -> vector<4x64xf32>
    %c0_8 = arith.constant 0 : index
    %c0_9 = arith.constant 0 : index
    %7 = vector.load %arg6[%c0_8, %c0_9] : memref<4x64xf32, #tpu.memory_space<vmem>>, vector<4x64xf32>
    tpu.vector_store %arg6[%c0_8, %c0_9], %6 {strides = array<i32>} : memref<4x64xf32, #tpu.memory_space<vmem>>, vector<4x64xf32>,
    %c0_10 = arith.constant 0 : index
    %c0_11 = arith.constant 0 : index
    %8 = vector.load %arg4[%c0_10, %c0_11] : memref<4x64xf32, #tpu.memory_space<vmem>>, vector<4x64xf32>
    %cst_12 = arith.constant dense<0.000000e+00> : vector<4x64xf32>
    %9 = tpu.matmul %8, %2, %cst_12 {dimension_numbers = #tpu.dot_dimension_numbers<[1], [1], [0], [0], [0, 0, 1, 0], [], []>, precision = #tpu.contract_precision<fp32>} : vector<4x64xf32>, vector<64x64xf32>, vector<4x64xf32> -> vector<4x64xf32>
    %c0_13 = arith.constant 0 : index
    %c0_14 = arith.constant 0 : index
    %10 = vector.load %arg7[%c0_13, %c0_14] : memref<4x64xf32, #tpu.memory_space<vmem>>, vector<4x64xf32>
    tpu.vector_store %arg7[%c0_13, %c0_14], %9 {strides = array<i32>} : memref<4x64xf32, #tpu.memory_space<vmem>>, vector<4x64xf32>,
    return
  }
  func.func @transform_0(%arg0: i32) -> (i32, i32) {
    %c0_i32 = arith.constant 0 : i32
    %c0_i32_0 = arith.constant 0 : i32
    return %arg0, %c0_i32 : i32, i32
  }
  func.func @transform_1(%arg0: i32) -> (i32, i32) {
    %c0_i32 = arith.constant 0 : i32
    %c0_i32_0 = arith.constant 0 : i32
    %c0_i32_1 = arith.constant 0 : i32
    return %c0_i32, %c0_i32_0 : i32, i32
  }
  func.func @transform_2(%arg0: i32) -> (i32, i32) {
    %c0_i32 = arith.constant 0 : i32
    %c0_i32_0 = arith.constant 0 : i32
    %c0_i32_1 = arith.constant 0 : i32
    return %c0_i32, %c0_i32_0 : i32, i32
  }
  func.func @transform_3(%arg0: i32) -> (i32, i32) {
    %c0_i32 = arith.constant 0 : i32
    %c0_i32_0 = arith.constant 0 : i32
    %c0_i32_1 = arith.constant 0 : i32
    return %c0_i32, %c0_i32_0 : i32, i32
  }
  func.func @transform_4(%arg0: i32) -> (i32, i32) {
    %c0_i32 = arith.constant 0 : i32
    %c0_i32_0 = arith.constant 0 : i32
    return %arg0, %c0_i32 : i32, i32
  }
  func.func @transform_5(%arg0: i32) -> (i32, i32) {
    %c0_i32 = arith.constant 0 : i32
    %c0_i32_0 = arith.constant 0 : i32
    return %c0_i32, %arg0 : i32, i32
  }
  func.func @transform_6(%arg0: i32) -> (i32, i32) {
    %c0_i32 = arith.constant 0 : i32
    %c0_i32_0 = arith.constant 0 : i32
    return %c0_i32, %arg0 : i32, i32
  }
}

</mosaic_0001>

<llo_original>
// kernel: tpu_custom_call.1
$region0: #{tpu_custom_call.1}
  #allocation0 [shape = 'u32[]', space=smem, size = 0x4, offset = 0x4, fixed_abs, tag = 'smem constant byte address 0x4 - core index']
  #allocation1 [shape = 'u32[72,128]{1,0:T(1,128)}', space=vmem, size = 0x9000, scoped, tag = 'internal scratch']
  %s0 = inlined_call_operand.vmem [shape: f32[64,16], index: 0, kind: input, shape index: {}]
  %s1 = inlined_call_operand.vmem [shape: f32[16,64], index: 1, kind: input, shape index: {}]
  %s2 = inlined_call_operand.vmem [shape: f32[4,64], index: 2, kind: input, shape index: {}]
  %s3 = inlined_call_operand.vmem [shape: f32[4,64], index: 3, kind: input, shape index: {}]
  %s4 = inlined_call_operand.hbm [shape: bf16[64,64], index: 4, kind: output, shape index: {0}]
  %s5 = inlined_call_operand.hbm [shape: f32[4,64], index: 5, kind: output, shape index: {1}]
  %s6 = inlined_call_operand.hbm [shape: f32[4,64], index: 6, kind: output, shape index: {2}]
  %7 = xla_tuple %s4, %s5, %s6
  %s8 = sld [smem:[#allocation0]]
  $region42: #{tpu_custom_call.1} parent=0
    _
  %s10 = ssub.s32 1, %s8
  %s11 = scalar_select 0, %s10, %s8
  $region1: #{tpu_custom_call.1} parent=0
    #allocation2 [shape = 'u8[16384]{0}', space=vmem, size = 0x4000, scoped, tag = 'output window, operand 0, single buffered']
    #allocation3 [shape = 's32[1]{0}', space=sflag, size = 0x4, scoped, tag = 'scoped memory for tpu_custom_call.1']
    #allocation4 [shape = 'u8[2048]{0}', space=vmem, size = 0x800, scoped, tag = 'output window, operand 1, single buffered']
    #allocation5 [shape = 's32[1]{0}', space=sflag, size = 0x4, scoped, tag = 'scoped memory for tpu_custom_call.1']
    #allocation6 [shape = 'u8[2048]{0}', space=vmem, size = 0x800, scoped, tag = 'output window, operand 2, single buffered']
    %12 = vsyncpa [#allocation3], 0
    %13 = vsyncpa [#allocation5], 0
    // Predicated region
    $region2: #{tpu_custom_call.1} parent=1 // pred_check
      _
    $region3: #{tpu_custom_call.1} parent=1 // pred_check_branch
      %15 = sbr.rel (0) target = $region5
    $region4: #{tpu_custom_call.1} parent=1 // pred_region
      _
    $region5: #{tpu_custom_call.1} parent=1 // pred_fallthru
      _
    // Predicated region
    $region6: #{tpu_custom_call.1} parent=1 // pred_check
      _
    $region7: #{tpu_custom_call.1} parent=1 // pred_check_branch
      %17 = sbr.rel (0) target = $region9
    $region8: #{tpu_custom_call.1} parent=1 // pred_region
      _
    $region9: #{tpu_custom_call.1} parent=1 // pred_fallthru
      _
    // Predicated region
    $region10: #{tpu_custom_call.1} parent=1 // pred_check
      _
    $region11: #{tpu_custom_call.1} parent=1 // pred_check_branch
      %19 = sbr.rel (0) target = $region13
    $region12: #{tpu_custom_call.1} parent=1 // pred_region
      _
    $region13: #{tpu_custom_call.1} parent=1 // pred_fallthru
      _
    // Predicated region
    $region14: #{tpu_custom_call.1} parent=1 // pred_check
      _
    $region15: #{tpu_custom_call.1} parent=1 // pred_check_branch
      %21 = sbr.rel (0) target = $region17
    $region16: #{tpu_custom_call.1} parent=1 // pred_region
      _
    $region17: #{tpu_custom_call.1} parent=1 // pred_fallthru
      _
    %v22 = vld [vmem:[%s0] sm:$0xff]
    %v23 = vld [vmem:[%s0 + $0x8] sm:$0xff]
    %v24 = vld [vmem:[%s0 + $0x10] sm:$0xff]
    %v25 = vld [vmem:[%s0 + $0x18] sm:$0xff]
    %v26 = vld [vmem:[%s0 + $0x20] sm:$0xff]
    %v27 = vld [vmem:[%s0 + $0x28] sm:$0xff]
    %v28 = vld [vmem:[%s0 + $0x30] sm:$0xff]
    %v29 = vld [vmem:[%s0 + $0x38] sm:$0xff]
    %v30 = vld [vmem:[%s1] sm:$0xff]
    %v31 = vld [vmem:[%s1 + $0x8] sm:$0xff]
    %vm32 = vcmask 130048
    %v34 = vsel %vm32, %v22, 0
    %v37 = vsel %vm32, %v23, 0
    %v40 = vsel %vm32, %v24, 0
    %v43 = vsel %vm32, %v25, 0
    %v46 = vsel %vm32, %v26, 0
    %v49 = vsel %vm32, %v27, 0
    %v52 = vsel %vm32, %v28, 0
    %v55 = vsel %vm32, %v29, 0
    %57 = vmatpush.msra.mxu0 0.0
    %58 = vmatpush.msra.mxu0 0.0
    %59 = vmatpush.msra.mxu0 0.0
    %60 = vmatpush.msra.mxu0 0.0
    %61 = vmatpush.msra.mxu0 0.0
    %62 = vmatpush.msra.mxu0 0.0
    %63 = vmatpush.msra.mxu0 0.0
    %64 = vmatpush.msra.mxu0 0.0
    %65 = vmatpush.msra.mxu0 0.0
    %66 = vmatpush.msra.mxu0 0.0
    %67 = vmatpush.msra.mxu0 0.0
    %68 = vmatpush.msra.mxu0 0.0
    %69 = vmatpush.msra.mxu0 0.0
    %70 = vmatpush.msra.mxu0 0.0
    %v71 = vand.u32 %v31, 4294901760
    %72 = vmatpush.msra.mxu0 %v71
    %v73 = vand.u32 %v30, 4294901760
    %74 = vmatpush.msra.mxu0 %v73
    %v75 = vand.u32 %v34, 4294901760
    %v76 = vsub.f32 %v34, %v75
    %v77 = vand.u32 %v76, 4294901760
    %v78 = vsub.f32 %v76, %v77
    %v79 = vand.u32 %v78, 4294901760
    %80 = vmatmul.f32.gmra.mxu0 %v79
    %v81 = vpop.f32.mrf.mxu0
    %v82 = vadd.f32 0.0, %v81
    %v83 = vand.u32 %v37, 4294901760
    %v84 = vsub.f32 %v37, %v83
    %v85 = vand.u32 %v84, 4294901760
    %v86 = vsub.f32 %v84, %v85
    %v87 = vand.u32 %v86, 4294901760
    %88 = vmatmul.f32.gmra.mxu0 %v87
    %v89 = vpop.f32.mrf.mxu0
    %v90 = vadd.f32 0.0, %v89
    %v91 = vand.u32 %v40, 4294901760
    %v92 = vsub.f32 %v40, %v91
    %v93 = vand.u32 %v92, 4294901760
    %v94 = vsub.f32 %v92, %v93
    %v95 = vand.u32 %v94, 4294901760
    %96 = vmatmul.f32.gmra.mxu0 %v95
    %v97 = vpop.f32.mrf.mxu0
    %v98 = vadd.f32 0.0, %v97
    %v99 = vand.u32 %v43, 4294901760
    %v100 = vsub.f32 %v43, %v99
    %v101 = vand.u32 %v100, 4294901760
    %v102 = vsub.f32 %v100, %v101
    %v103 = vand.u32 %v102, 4294901760
    %104 = vmatmul.f32.gmra.mxu0 %v103
    %v105 = vpop.f32.mrf.mxu0
    %v106 = vadd.f32 0.0, %v105
    %v107 = vand.u32 %v46, 4294901760
    %v108 = vsub.f32 %v46, %v107
    %v109 = vand.u32 %v108, 4294901760
    %v110 = vsub.f32 %v108, %v109
    %v111 = vand.u32 %v110, 4294901760
    %112 = vmatmul.f32.gmra.mxu0 %v111
    %v113 = vpop.f32.mrf.mxu0
    %v114 = vadd.f32 0.0, %v113
    %v115 = vand.u32 %v49, 4294901760
    %v116 = vsub.f32 %v49, %v115
    %v117 = vand.u32 %v116, 4294901760
    %v118 = vsub.f32 %v116, %v117
    %v119 = vand.u32 %v118, 4294901760
    %120 = vmatmul.f32.gmra.mxu0 %v119
    %v121 = vpop.f32.mrf.mxu0
    %v122 = vadd.f32 0.0, %v121
    %v123 = vand.u32 %v52, 4294901760
    %v124 = vsub.f32 %v52, %v123
    %v125 = vand.u32 %v124, 4294901760
    %v126 = vsub.f32 %v124, %v125
    %v127 = vand.u32 %v126, 4294901760
    %128 = vmatmul.f32.gmra.mxu0 %v127
    %v129 = vpop.f32.mrf.mxu0
    %v130 = vadd.f32 0.0, %v129
    %v131 = vand.u32 %v55, 4294901760
    %v132 = vsub.f32 %v55, %v131
    %v133 = vand.u32 %v132, 4294901760
    %v134 = vsub.f32 %v132, %v133
    %v135 = vand.u32 %v134, 4294901760
    %136 = vmatmul.f32.gmra.mxu0 %v135
    %v137 = vpop.f32.mrf.mxu0
    %v138 = vadd.f32 0.0, %v137
    %139 = vdwg.mxu0
    %140 = vmatpush.msra.mxu0 0.0
    %141 = vmatpush.msra.mxu0 0.0
    %142 = vmatpush.msra.mxu0 0.0
    %143 = vmatpush.msra.mxu0 0.0
    %144 = vmatpush.msra.mxu0 0.0
    %145 = vmatpush.msra.mxu0 0.0
    %146 = vmatpush.msra.mxu0 0.0
    %147 = vmatpush.msra.mxu0 0.0
    %148 = vmatpush.msra.mxu0 0.0
    %149 = vmatpush.msra.mxu0 0.0
    %150 = vmatpush.msra.mxu0 0.0
    %151 = vmatpush.msra.mxu0 0.0
    %152 = vmatpush.msra.mxu0 0.0
    %153 = vmatpush.msra.mxu0 0.0
    %v154 = vand.u32 %v31, 4294901760
    %v155 = vsub.f32 %v31, %v154
    %v156 = vand.u32 %v155, 4294901760
    %v157 = vsub.f32 %v155, %v156
    %v158 = vand.u32 %v157, 4294901760
    %159 = vmatpush.msra.mxu0 %v158
    %v160 = vand.u32 %v30, 4294901760
    %v161 = vsub.f32 %v30, %v160
    %v162 = vand.u32 %v161, 4294901760
    %v163 = vsub.f32 %v161, %v162
    %v164 = vand.u32 %v163, 4294901760
    %165 = vmatpush.msra.mxu0 %v164
    %v166 = vand.u32 %v34, 4294901760
    %167 = vmatmul.f32.gmra.mxu0 %v166
    %v168 = vpop.f32.mrf.mxu0
    %v169 = vadd.f32 %v82, %v168
    %v170 = vand.u32 %v37, 4294901760
    %171 = vmatmul.f32.gmra.mxu0 %v170
    %v172 = vpop.f32.mrf.mxu0
    %v173 = vadd.f32 %v90, %v172
    %v174 = vand.u32 %v40, 4294901760
    %175 = vmatmul.f32.gmra.mxu0 %v174
    %v176 = vpop.f32.mrf.mxu0
    %v177 = vadd.f32 %v98, %v176
    %v178 = vand.u32 %v43, 4294901760
    %179 = vmatmul.f32.gmra.mxu0 %v178
    %v180 = vpop.f32.mrf.mxu0
    %v181 = vadd.f32 %v106, %v180
    %v182 = vand.u32 %v46, 4294901760
    %183 = vmatmul.f32.gmra.mxu0 %v182
    %v184 = vpop.f32.mrf.mxu0
    %v185 = vadd.f32 %v114, %v184
    %v186 = vand.u32 %v49, 4294901760
    %187 = vmatmul.f32.gmra.mxu0 %v186
    %v188 = vpop.f32.mrf.mxu0
    %v189 = vadd.f32 %v122, %v188
    %v190 = vand.u32 %v52, 4294901760
    %191 = vmatmul.f32.gmra.mxu0 %v190
    %v192 = vpop.f32.mrf.mxu0
    %v193 = vadd.f32 %v130, %v192
    %v194 = vand.u32 %v55, 4294901760
    %195 = vmatmul.f32.gmra.mxu0 %v194
    %v196 = vpop.f32.mrf.mxu0
    %v197 = vadd.f32 %v138, %v196
    %198 = vdwg.mxu0
    %199 = vmatpush.msra.mxu0 0.0
    %200 = vmatpush.msra.mxu0 0.0
    %201 = vmatpush.msra.mxu0 0.0
    %202 = vmatpush.msra.mxu0 0.0
    %203 = vmatpush.msra.mxu0 0.0
    %204 = vmatpush.msra.mxu0 0.0
    %205 = vmatpush.msra.mxu0 0.0
    %206 = vmatpush.msra.mxu0 0.0
    %207 = vmatpush.msra.mxu0 0.0
    %208 = vmatpush.msra.mxu0 0.0
    %209 = vmatpush.msra.mxu0 0.0
    %210 = vmatpush.msra.mxu0 0.0
    %211 = vmatpush.msra.mxu0 0.0
    %212 = vmatpush.msra.mxu0 0.0
    %v213 = vand.u32 %v31, 4294901760
    %v214 = vsub.f32 %v31, %v213
    %215 = vmatpush.msra.mxu0 %v214
    %v216 = vand.u32 %v30, 4294901760
    %v217 = vsub.f32 %v30, %v216
    %218 = vmatpush.msra.mxu0 %v217
    %v219 = vand.u32 %v34, 4294901760
    %v220 = vsub.f32 %v34, %v219
    %221 = vmatmul.f32.gmra.mxu0 %v220
    %v222 = vpop.f32.mrf.mxu0
    %v223 = vadd.f32 %v169, %v222
    %v224 = vand.u32 %v37, 4294901760
    %v225 = vsub.f32 %v37, %v224
    %226 = vmatmul.f32.gmra.mxu0 %v225
    %v227 = vpop.f32.mrf.mxu0
    %v228 = vadd.f32 %v173, %v227
    %v229 = vand.u32 %v40, 4294901760
    %v230 = vsub.f32 %v40, %v229
    %231 = vmatmul.f32.gmra.mxu0 %v230
    %v232 = vpop.f32.mrf.mxu0
    %v233 = vadd.f32 %v177, %v232
    %v234 = vand.u32 %v43, 4294901760
    %v235 = vsub.f32 %v43, %v234
    %236 = vmatmul.f32.gmra.mxu0 %v235
    %v237 = vpop.f32.mrf.mxu0
    %v238 = vadd.f32 %v181, %v237
    %v239 = vand.u32 %v46, 4294901760
    %v240 = vsub.f32 %v46, %v239
    %241 = vmatmul.f32.gmra.mxu0 %v240
    %v242 = vpop.f32.mrf.mxu0
    %v243 = vadd.f32 %v185, %v242
    %v244 = vand.u32 %v49, 4294901760
    %v245 = vsub.f32 %v49, %v244
    %246 = vmatmul.f32.gmra.mxu0 %v245
    %v247 = vpop.f32.mrf.mxu0
    %v248 = vadd.f32 %v189, %v247
    %v249 = vand.u32 %v52, 4294901760
    %v250 = vsub.f32 %v52, %v249
    %251 = vmatmul.f32.gmra.mxu0 %v250
    %v252 = vpop.f32.mrf.mxu0
    %v253 = vadd.f32 %v193, %v252
    %v254 = vand.u32 %v55, 4294901760
    %v255 = vsub.f32 %v55, %v254
    %256 = vmatmul.f32.gmra.mxu0 %v255
    %v257 = vpop.f32.mrf.mxu0
    %v258 = vadd.f32 %v197, %v257
    %259 = vdwg.mxu0
    %260 = vmatpush.msra.mxu0 0.0
    %261 = vmatpush.msra.mxu0 0.0
    %262 = vmatpush.msra.mxu0 0.0
    %263 = vmatpush.msra.mxu0 0.0
    %264 = vmatpush.msra.mxu0 0.0
    %265 = vmatpush.msra.mxu0 0.0
    %266 = vmatpush.msra.mxu0 0.0
    %267 = vmatpush.msra.mxu0 0.0
    %268 = vmatpush.msra.mxu0 0.0
    %269 = vmatpush.msra.mxu0 0.0
    %270 = vmatpush.msra.mxu0 0.0
    %271 = vmatpush.msra.mxu0 0.0
    %272 = vmatpush.msra.mxu0 0.0
    %273 = vmatpush.msra.mxu0 0.0
    %v274 = vand.u32 %v31, 4294901760
    %275 = vmatpush.msra.mxu0 %v274
    %v276 = vand.u32 %v30, 4294901760
    %277 = vmatpush.msra.mxu0 %v276
    %v278 = vand.u32 %v34, 4294901760
    %v279 = vsub.f32 %v34, %v278
    %v280 = vand.u32 %v279, 4294901760
    %281 = vmatmul.f32.gmra.mxu0 %v280
    %v282 = vpop.f32.mrf.mxu0
    %v283 = vadd.f32 %v223, %v282
    %v284 = vand.u32 %v37, 4294901760
    %v285 = vsub.f32 %v37, %v284
    %v286 = vand.u32 %v285, 4294901760
    %287 = vmatmul.f32.gmra.mxu0 %v286
    %v288 = vpop.f32.mrf.mxu0
    %v289 = vadd.f32 %v228, %v288
    %v290 = vand.u32 %v40, 4294901760
    %v291 = vsub.f32 %v40, %v290
    %v292 = vand.u32 %v291, 4294901760
    %293 = vmatmul.f32.gmra.mxu0 %v292
    %v294 = vpop.f32.mrf.mxu0
    %v295 = vadd.f32 %v233, %v294
    %v296 = vand.u32 %v43, 4294901760
    %v297 = vsub.f32 %v43, %v296
    %v298 = vand.u32 %v297, 4294901760
    %299 = vmatmul.f32.gmra.mxu0 %v298
    %v300 = vpop.f32.mrf.mxu0
    %v301 = vadd.f32 %v238, %v300
    %v302 = vand.u32 %v46, 4294901760
    %v303 = vsub.f32 %v46, %v302
    %v304 = vand.u32 %v303, 4294901760
    %305 = vmatmul.f32.gmra.mxu0 %v304
    %v306 = vpop.f32.mrf.mxu0
    %v307 = vadd.f32 %v243, %v306
    %v308 = vand.u32 %v49, 4294901760
    %v309 = vsub.f32 %v49, %v308
    %v310 = vand.u32 %v309, 4294901760
    %311 = vmatmul.f32.gmra.mxu0 %v310
    %v312 = vpop.f32.mrf.mxu0
    %v313 = vadd.f32 %v248, %v312
    %v314 = vand.u32 %v52, 4294901760
    %v315 = vsub.f32 %v52, %v314
    %v316 = vand.u32 %v315, 4294901760
    %317 = vmatmul.f32.gmra.mxu0 %v316
    %v318 = vpop.f32.mrf.mxu0
    %v319 = vadd.f32 %v253, %v318
    %v320 = vand.u32 %v55, 4294901760
    %v321 = vsub.f32 %v55, %v320
    %v322 = vand.u32 %v321, 4294901760
    %323 = vmatmul.f32.gmra.mxu0 %v322
    %v324 = vpop.f32.mrf.mxu0
    %v325 = vadd.f32 %v258, %v324
    %326 = vdwg.mxu0
    %327 = vmatpush.msra.mxu0 0.0
    %328 = vmatpush.msra.mxu0 0.0
    %329 = vmatpush.msra.mxu0 0.0
    %330 = vmatpush.msra.mxu0 0.0
    %331 = vmatpush.msra.mxu0 0.0
    %332 = vmatpush.msra.mxu0 0.0
    %333 = vmatpush.msra.mxu0 0.0
    %334 = vmatpush.msra.mxu0 0.0
    %335 = vmatpush.msra.mxu0 0.0
    %336 = vmatpush.msra.mxu0 0.0
    %337 = vmatpush.msra.mxu0 0.0
    %338 = vmatpush.msra.mxu0 0.0
    %339 = vmatpush.msra.mxu0 0.0
    %340 = vmatpush.msra.mxu0 0.0
    %v341 = vand.u32 %v31, 4294901760
    %v342 = vsub.f32 %v31, %v341
    %v343 = vand.u32 %v342, 4294901760
    %344 = vmatpush.msra.mxu0 %v343
    %v345 = vand.u32 %v30, 4294901760
    %v346 = vsub.f32 %v30, %v345
    %v347 = vand.u32 %v346, 4294901760
    %348 = vmatpush.msra.mxu0 %v347
    %v349 = vand.u32 %v34, 4294901760
    %350 = vmatmul.f32.gmra.mxu0 %v349
    %v351 = vpop.f32.mrf.mxu0
    %v352 = vadd.f32 %v283, %v351
    %v353 = vand.u32 %v37, 4294901760
    %354 = vmatmul.f32.gmra.mxu0 %v353
    %v355 = vpop.f32.mrf.mxu0
    %v356 = vadd.f32 %v289, %v355
    %v357 = vand.u32 %v40, 4294901760
    %358 = vmatmul.f32.gmra.mxu0 %v357
    %v359 = vpop.f32.mrf.mxu0
    %v360 = vadd.f32 %v295, %v359
    %v361 = vand.u32 %v43, 4294901760
    %362 = vmatmul.f32.gmra.mxu0 %v361
    %v363 = vpop.f32.mrf.mxu0
    %v364 = vadd.f32 %v301, %v363
    %v365 = vand.u32 %v46, 4294901760
    %366 = vmatmul.f32.gmra.mxu0 %v365
    %v367 = vpop.f32.mrf.mxu0
    %v368 = vadd.f32 %v307, %v367
    %v369 = vand.u32 %v49, 4294901760
    %370 = vmatmul.f32.gmra.mxu0 %v369
    %v371 = vpop.f32.mrf.mxu0
    %v372 = vadd.f32 %v313, %v371
    %v373 = vand.u32 %v52, 4294901760
    %374 = vmatmul.f32.gmra.mxu0 %v373
    %v375 = vpop.f32.mrf.mxu0
    %v376 = vadd.f32 %v319, %v375
    %v377 = vand.u32 %v55, 4294901760
    %378 = vmatmul.f32.gmra.mxu0 %v377
    %v379 = vpop.f32.mrf.mxu0
    %v380 = vadd.f32 %v325, %v379
    %381 = vdwg.mxu0
    %382 = vmatpush.msra.mxu0 0.0
    %383 = vmatpush.msra.mxu0 0.0
    %384 = vmatpush.msra.mxu0 0.0
    %385 = vmatpush.msra.mxu0 0.0
    %386 = vmatpush.msra.mxu0 0.0
    %387 = vmatpush.msra.mxu0 0.0
    %388 = vmatpush.msra.mxu0 0.0
    %389 = vmatpush.msra.mxu0 0.0
    %390 = vmatpush.msra.mxu0 0.0
    %391 = vmatpush.msra.mxu0 0.0
    %392 = vmatpush.msra.mxu0 0.0
    %393 = vmatpush.msra.mxu0 0.0
    %394 = vmatpush.msra.mxu0 0.0
    %395 = vmatpush.msra.mxu0 0.0
    %v396 = vand.u32 %v31, 4294901760
    %397 = vmatpush.msra.mxu0 %v396
    %v398 = vand.u32 %v30, 4294901760
    %399 = vmatpush.msra.mxu0 %v398
    %v400 = vand.u32 %v34, 4294901760
    %401 = vmatmul.f32.gmra.mxu0 %v400
    %v402 = vpop.f32.mrf.mxu0
    %v403 = vadd.f32 %v352, %v402
    %v404 = vand.u32 %v37, 4294901760
    %405 = vmatmul.f32.gmra.mxu0 %v404
    %v406 = vpop.f32.mrf.mxu0
    %v407 = vadd.f32 %v356, %v406
    %v408 = vand.u32 %v40, 4294901760
    %409 = vmatmul.f32.gmra.mxu0 %v408
    %v410 = vpop.f32.mrf.mxu0
    %v411 = vadd.f32 %v360, %v410
    %v412 = vand.u32 %v43, 4294901760
    %413 = vmatmul.f32.gmra.mxu0 %v412
    %v414 = vpop.f32.mrf.mxu0
    %v415 = vadd.f32 %v364, %v414
    %v416 = vand.u32 %v46, 4294901760
    %417 = vmatmul.f32.gmra.mxu0 %v416
    %v418 = vpop.f32.mrf.mxu0
    %v419 = vadd.f32 %v368, %v418
    %v420 = vand.u32 %v49, 4294901760
    %421 = vmatmul.f32.gmra.mxu0 %v420
    %v422 = vpop.f32.mrf.mxu0
    %v423 = vadd.f32 %v372, %v422
    %v424 = vand.u32 %v52, 4294901760
    %425 = vmatmul.f32.gmra.mxu0 %v424
    %v426 = vpop.f32.mrf.mxu0
    %v427 = vadd.f32 %v376, %v426
    %v428 = vand.u32 %v55, 4294901760
    %429 = vmatmul.f32.gmra.mxu0 %v428
    %v430 = vpop.f32.mrf.mxu0
    %v431 = vadd.f32 %v380, %v430
    %432 = vdwg.mxu0
    %v433 = vpack.c.bf16 %v403, %v403
    %v434 = vpack.c.bf16 %v407, %v407
    %v435 = vpack.c.bf16 %v411, %v411
    %v436 = vpack.c.bf16 %v415, %v415
    %v437 = vpack.c.bf16 %v419, %v419
    %v438 = vpack.c.bf16 %v423, %v423
    %v439 = vpack.c.bf16 %v427, %v427
    %v440 = vpack.c.bf16 %v431, %v431
    %vm441 = vcmask 519168
    %442 = vst.msk [vmem:[#allocation2] sm:$0xf] %vm441, %v433
    %443 = vst.msk [vmem:[#allocation2 + $0x4] sm:$0xf] %vm441, %v434
    %444 = vst.msk [vmem:[#allocation2 + $0x8] sm:$0xf] %vm441, %v435
    %445 = vst.msk [vmem:[#allocation2 + $0xc] sm:$0xf] %vm441, %v436
    %446 = vst.msk [vmem:[#allocation2 + $0x10] sm:$0xf] %vm441, %v437
    %447 = vst.msk [vmem:[#allocation2 + $0x14] sm:$0xf] %vm441, %v438
    %448 = vst.msk [vmem:[#allocation2 + $0x18] sm:$0xf] %vm441, %v439
    %449 = vst.msk [vmem:[#allocation2 + $0x1c] sm:$0xf] %vm441, %v440
    %v450 = vld [vmem:[%s2] sm:$0xf]
    %vm451 = vcmask 523264
    %v453 = vsel %vm451, %v450, 0
    %v456 = vsel %vm451, %v403, 0
    %v459 = vsel %vm451, %v407, 0
    %v462 = vsel %vm451, %v411, 0
    %v465 = vsel %vm451, %v415, 0
    %v468 = vsel %vm451, %v419, 0
    %v471 = vsel %vm451, %v423, 0
    %v474 = vsel %vm451, %v427, 0
    %v477 = vsel %vm451, %v431, 0
    %479 = vmatpush.xpose.msra.mxu0 0.0
    %480 = vmatpush.xpose.msra.mxu0 0.0
    %481 = vmatpush.xpose.msra.mxu0 0.0
    %482 = vmatpush.xpose.msra.mxu0 0.0
    %483 = vmatpush.xpose.msra.mxu0 0.0
    %484 = vmatpush.xpose.msra.mxu0 0.0
    %485 = vmatpush.xpose.msra.mxu0 0.0
    %486 = vmatpush.xpose.msra.mxu0 0.0
    %v487 = vand.u32 %v477, 4294901760
    %488 = vmatpush.xpose.msra.mxu0 %v487
    %v489 = vand.u32 %v474, 4294901760
    %490 = vmatpush.xpose.msra.mxu0 %v489
    %v491 = vand.u32 %v471, 4294901760
    %492 = vmatpush.xpose.msra.mxu0 %v491
    %v493 = vand.u32 %v468, 4294901760
    %494 = vmatpush.xpose.msra.mxu0 %v493
    %v495 = vand.u32 %v465, 4294901760
    %496 = vmatpush.xpose.msra.mxu0 %v495
    %v497 = vand.u32 %v462, 4294901760
    %498 = vmatpush.xpose.msra.mxu0 %v497
    %v499 = vand.u32 %v459, 4294901760
    %500 = vmatpush.xpose.msra.mxu0 %v499
    %v501 = vand.u32 %v456, 4294901760
    %502 = vmatpush.xpose.msra.mxu0 %v501
    %v503 = vand.u32 %v453, 4294901760
    %v504 = vsub.f32 %v453, %v503
    %v505 = vand.u32 %v504, 4294901760
    %v506 = vsub.f32 %v504, %v505
    %v507 = vand.u32 %v506, 4294901760
    %508 = vmatmul.f32.gmra.mxu0 %v507
    %v509 = vpop.f32.mrf.mxu0
    %v510 = vadd.f32 0.0, %v509
    %511 = vdwg.mxu0
    %512 = vmatpush.xpose.msra.mxu0 0.0
    %513 = vmatpush.xpose.msra.mxu0 0.0
    %514 = vmatpush.xpose.msra.mxu0 0.0
    %515 = vmatpush.xpose.msra.mxu0 0.0
    %516 = vmatpush.xpose.msra.mxu0 0.0
    %517 = vmatpush.xpose.msra.mxu0 0.0
    %518 = vmatpush.xpose.msra.mxu0 0.0
    %519 = vmatpush.xpose.msra.mxu0 0.0
    %v520 = vand.u32 %v477, 4294901760
    %v521 = vsub.f32 %v477, %v520
    %v522 = vand.u32 %v521, 4294901760
    %v523 = vsub.f32 %v521, %v522
    %v524 = vand.u32 %v523, 4294901760
    %525 = vmatpush.xpose.msra.mxu0 %v524
    %v526 = vand.u32 %v474, 4294901760
    %v527 = vsub.f32 %v474, %v526
    %v528 = vand.u32 %v527, 4294901760
    %v529 = vsub.f32 %v527, %v528
    %v530 = vand.u32 %v529, 4294901760
    %531 = vmatpush.xpose.msra.mxu0 %v530
    %v532 = vand.u32 %v471, 4294901760
    %v533 = vsub.f32 %v471, %v532
    %v534 = vand.u32 %v533, 4294901760
    %v535 = vsub.f32 %v533, %v534
    %v536 = vand.u32 %v535, 4294901760
    %537 = vmatpush.xpose.msra.mxu0 %v536
    %v538 = vand.u32 %v468, 4294901760
    %v539 = vsub.f32 %v468, %v538
    %v540 = vand.u32 %v539, 4294901760
    %v541 = vsub.f32 %v539, %v540
    %v542 = vand.u32 %v541, 4294901760
    %543 = vmatpush.xpose.msra.mxu0 %v542
    %v544 = vand.u32 %v465, 4294901760
    %v545 = vsub.f32 %v465, %v544
    %v546 = vand.u32 %v545, 4294901760
    %v547 = vsub.f32 %v545, %v546
    %v548 = vand.u32 %v547, 4294901760
    %549 = vmatpush.xpose.msra.mxu0 %v548
    %v550 = vand.u32 %v462, 4294901760
    %v551 = vsub.f32 %v462, %v550
    %v552 = vand.u32 %v551, 4294901760
    %v553 = vsub.f32 %v551, %v552
    %v554 = vand.u32 %v553, 4294901760
    %555 = vmatpush.xpose.msra.mxu0 %v554
    %v556 = vand.u32 %v459, 4294901760
    %v557 = vsub.f32 %v459, %v556
    %v558 = vand.u32 %v557, 4294901760
    %v559 = vsub.f32 %v557, %v558
    %v560 = vand.u32 %v559, 4294901760
    %561 = vmatpush.xpose.msra.mxu0 %v560
    %v562 = vand.u32 %v456, 4294901760
    %v563 = vsub.f32 %v456, %v562
    %v564 = vand.u32 %v563, 4294901760
    %v565 = vsub.f32 %v563, %v564
    %v566 = vand.u32 %v565, 4294901760
    %567 = vmatpush.xpose.msra.mxu0 %v566
    %v568 = vand.u32 %v453, 4294901760
    %569 = vmatmul.f32.gmra.mxu0 %v568
    %v570 = vpop.f32.mrf.mxu0
    %v571 = vadd.f32 %v510, %v570
    %572 = vdwg.mxu0
    %573 = vmatpush.xpose.msra.mxu0 0.0
    %574 = vmatpush.xpose.msra.mxu0 0.0
    %575 = vmatpush.xpose.msra.mxu0 0.0
    %576 = vmatpush.xpose.msra.mxu0 0.0
    %577 = vmatpush.xpose.msra.mxu0 0.0
    %578 = vmatpush.xpose.msra.mxu0 0.0
    %579 = vmatpush.xpose.msra.mxu0 0.0
    %580 = vmatpush.xpose.msra.mxu0 0.0
    %v581 = vand.u32 %v477, 4294901760
    %v582 = vsub.f32 %v477, %v581
    %583 = vmatpush.xpose.msra.mxu0 %v582
    %v584 = vand.u32 %v474, 4294901760
    %v585 = vsub.f32 %v474, %v584
    %586 = vmatpush.xpose.msra.mxu0 %v585
    %v587 = vand.u32 %v471, 4294901760
    %v588 = vsub.f32 %v471, %v587
    %589 = vmatpush.xpose.msra.mxu0 %v588
    %v590 = vand.u32 %v468, 4294901760
    %v591 = vsub.f32 %v468, %v590
    %592 = vmatpush.xpose.msra.mxu0 %v591
    %v593 = vand.u32 %v465, 4294901760
    %v594 = vsub.f32 %v465, %v593
    %595 = vmatpush.xpose.msra.mxu0 %v594
    %v596 = vand.u32 %v462, 4294901760
    %v597 = vsub.f32 %v462, %v596
    %598 = vmatpush.xpose.msra.mxu0 %v597
    %v599 = vand.u32 %v459, 4294901760
    %v600 = vsub.f32 %v459, %v599
    %601 = vmatpush.xpose.msra.mxu0 %v600
    %v602 = vand.u32 %v456, 4294901760
    %v603 = vsub.f32 %v456, %v602
    %604 = vmatpush.xpose.msra.mxu0 %v603
    %v605 = vand.u32 %v453, 4294901760
    %v606 = vsub.f32 %v453, %v605
    %607 = vmatmul.f32.gmra.mxu0 %v606
    %v608 = vpop.f32.mrf.mxu0
    %v609 = vadd.f32 %v571, %v608
    %610 = vdwg.mxu0
    %611 = vmatpush.xpose.msra.mxu0 0.0
    %612 = vmatpush.xpose.msra.mxu0 0.0
    %613 = vmatpush.xpose.msra.mxu0 0.0
    %614 = vmatpush.xpose.msra.mxu0 0.0
    %615 = vmatpush.xpose.msra.mxu0 0.0
    %616 = vmatpush.xpose.msra.mxu0 0.0
    %617 = vmatpush.xpose.msra.mxu0 0.0
    %618 = vmatpush.xpose.msra.mxu0 0.0
    %v619 = vand.u32 %v477, 4294901760
    %620 = vmatpush.xpose.msra.mxu0 %v619
    %v621 = vand.u32 %v474, 4294901760
    %622 = vmatpush.xpose.msra.mxu0 %v621
    %v623 = vand.u32 %v471, 4294901760
    %624 = vmatpush.xpose.msra.mxu0 %v623
    %v625 = vand.u32 %v468, 4294901760
    %626 = vmatpush.xpose.msra.mxu0 %v625
    %v627 = vand.u32 %v465, 4294901760
    %628 = vmatpush.xpose.msra.mxu0 %v627
    %v629 = vand.u32 %v462, 4294901760
    %630 = vmatpush.xpose.msra.mxu0 %v629
    %v631 = vand.u32 %v459, 4294901760
    %632 = vmatpush.xpose.msra.mxu0 %v631
    %v633 = vand.u32 %v456, 4294901760
    %634 = vmatpush.xpose.msra.mxu0 %v633
    %v635 = vand.u32 %v453, 4294901760
    %v636 = vsub.f32 %v453, %v635
    %v637 = vand.u32 %v636, 4294901760
    %638 = vmatmul.f32.gmra.mxu0 %v637
    %v639 = vpop.f32.mrf.mxu0
    %v640 = vadd.f32 %v609, %v639
    %641 = vdwg.mxu0
    %642 = vmatpush.xpose.msra.mxu0 0.0
    %643 = vmatpush.xpose.msra.mxu0 0.0
    %644 = vmatpush.xpose.msra.mxu0 0.0
    %645 = vmatpush.xpose.msra.mxu0 0.0
    %646 = vmatpush.xpose.msra.mxu0 0.0
    %647 = vmatpush.xpose.msra.mxu0 0.0
    %648 = vmatpush.xpose.msra.mxu0 0.0
    %649 = vmatpush.xpose.msra.mxu0 0.0
    %v650 = vand.u32 %v477, 4294901760
    %v651 = vsub.f32 %v477, %v650
    %v652 = vand.u32 %v651, 4294901760
    %653 = vmatpush.xpose.msra.mxu0 %v652
    %v654 = vand.u32 %v474, 4294901760
    %v655 = vsub.f32 %v474, %v654
    %v656 = vand.u32 %v655, 4294901760
    %657 = vmatpush.xpose.msra.mxu0 %v656
    %v658 = vand.u32 %v471, 4294901760
    %v659 = vsub.f32 %v471, %v658
    %v660 = vand.u32 %v659, 4294901760
    %661 = vmatpush.xpose.msra.mxu0 %v660
    %v662 = vand.u32 %v468, 4294901760
    %v663 = vsub.f32 %v468, %v662
    %v664 = vand.u32 %v663, 4294901760
    %665 = vmatpush.xpose.msra.mxu0 %v664
    %v666 = vand.u32 %v465, 4294901760
    %v667 = vsub.f32 %v465, %v666
    %v668 = vand.u32 %v667, 4294901760
    %669 = vmatpush.xpose.msra.mxu0 %v668
    %v670 = vand.u32 %v462, 4294901760
    %v671 = vsub.f32 %v462, %v670
    %v672 = vand.u32 %v671, 4294901760
    %673 = vmatpush.xpose.msra.mxu0 %v672
    %v674 = vand.u32 %v459, 4294901760
    %v675 = vsub.f32 %v459, %v674
    %v676 = vand.u32 %v675, 4294901760
    %677 = vmatpush.xpose.msra.mxu0 %v676
    %v678 = vand.u32 %v456, 4294901760
    %v679 = vsub.f32 %v456, %v678
    %v680 = vand.u32 %v679, 4294901760
    %681 = vmatpush.xpose.msra.mxu0 %v680
    %v682 = vand.u32 %v453, 4294901760
    %683 = vmatmul.f32.gmra.mxu0 %v682
    %v684 = vpop.f32.mrf.mxu0
    %v685 = vadd.f32 %v640, %v684
    %686 = vdwg.mxu0
    %687 = vmatpush.xpose.msra.mxu0 0.0
    %688 = vmatpush.xpose.msra.mxu0 0.0
    %689 = vmatpush.xpose.msra.mxu0 0.0
    %690 = vmatpush.xpose.msra.mxu0 0.0
    %691 = vmatpush.xpose.msra.mxu0 0.0
    %692 = vmatpush.xpose.msra.mxu0 0.0
    %693 = vmatpush.xpose.msra.mxu0 0.0
    %694 = vmatpush.xpose.msra.mxu0 0.0
    %v695 = vand.u32 %v477, 4294901760
    %696 = vmatpush.xpose.msra.mxu0 %v695
    %v697 = vand.u32 %v474, 4294901760
    %698 = vmatpush.xpose.msra.mxu0 %v697
    %v699 = vand.u32 %v471, 4294901760
    %700 = vmatpush.xpose.msra.mxu0 %v699
    %v701 = vand.u32 %v468, 4294901760
    %702 = vmatpush.xpose.msra.mxu0 %v701
    %v703 = vand.u32 %v465, 4294901760
    %704 = vmatpush.xpose.msra.mxu0 %v703
    %v705 = vand.u32 %v462, 4294901760
    %706 = vmatpush.xpose.msra.mxu0 %v705
    %v707 = vand.u32 %v459, 4294901760
    %708 = vmatpush.xpose.msra.mxu0 %v707
    %v709 = vand.u32 %v456, 4294901760
    %710 = vmatpush.xpose.msra.mxu0 %v709
    %v711 = vand.u32 %v453, 4294901760
    %712 = vmatmul.f32.gmra.mxu0 %v711
    %v713 = vpop.f32.mrf.mxu0
    %v714 = vadd.f32 %v685, %v713
    %715 = vdwg.mxu0
    %716 = vst.msk [vmem:[#allocation4] sm:$0xf] %vm441, %v714
    %v717 = vld [vmem:[%s3] sm:$0xf]
    %v719 = vsel %vm451, %v717, 0
    %721 = vmatpush.xpose.msra.mxu0 0.0
    %722 = vmatpush.xpose.msra.mxu0 0.0
    %723 = vmatpush.xpose.msra.mxu0 0.0
    %724 = vmatpush.xpose.msra.mxu0 0.0
    %725 = vmatpush.xpose.msra.mxu0 0.0
    %726 = vmatpush.xpose.msra.mxu0 0.0
    %727 = vmatpush.xpose.msra.mxu0 0.0
    %728 = vmatpush.xpose.msra.mxu0 0.0
    %v729 = vand.u32 %v477, 4294901760
    %730 = vmatpush.xpose.msra.mxu0 %v729
    %v731 = vand.u32 %v474, 4294901760
    %732 = vmatpush.xpose.msra.mxu0 %v731
    %v733 = vand.u32 %v471, 4294901760
    %734 = vmatpush.xpose.msra.mxu0 %v733
    %v735 = vand.u32 %v468, 4294901760
    %736 = vmatpush.xpose.msra.mxu0 %v735
    %v737 = vand.u32 %v465, 4294901760
    %738 = vmatpush.xpose.msra.mxu0 %v737
    %v739 = vand.u32 %v462, 4294901760
    %740 = vmatpush.xpose.msra.mxu0 %v739
    %v741 = vand.u32 %v459, 4294901760
    %742 = vmatpush.xpose.msra.mxu0 %v741
    %v743 = vand.u32 %v456, 4294901760
    %744 = vmatpush.xpose.msra.mxu0 %v743
    %v745 = vand.u32 %v719, 4294901760
    %v746 = vsub.f32 %v719, %v745
    %v747 = vand.u32 %v746, 4294901760
    %v748 = vsub.f32 %v746, %v747
    %v749 = vand.u32 %v748, 4294901760
    %750 = vmatmul.f32.gmra.mxu0 %v749
    %v751 = vpop.f32.mrf.mxu0
    %v752 = vadd.f32 0.0, %v751
    %753 = vdwg.mxu0
    %754 = vmatpush.xpose.msra.mxu0 0.0
    %755 = vmatpush.xpose.msra.mxu0 0.0
    %756 = vmatpush.xpose.msra.mxu0 0.0
    %757 = vmatpush.xpose.msra.mxu0 0.0
    %758 = vmatpush.xpose.msra.mxu0 0.0
    %759 = vmatpush.xpose.msra.mxu0 0.0
    %760 = vmatpush.xpose.msra.mxu0 0.0
    %761 = vmatpush.xpose.msra.mxu0 0.0
    %v762 = vand.u32 %v477, 4294901760
    %v763 = vsub.f32 %v477, %v762
    %v764 = vand.u32 %v763, 4294901760
    %v765 = vsub.f32 %v763, %v764
    %v766 = vand.u32 %v765, 4294901760
    %767 = vmatpush.xpose.msra.mxu0 %v766
    %v768 = vand.u32 %v474, 4294901760
    %v769 = vsub.f32 %v474, %v768
    %v770 = vand.u32 %v769, 4294901760
    %v771 = vsub.f32 %v769, %v770
    %v772 = vand.u32 %v771, 4294901760
    %773 = vmatpush.xpose.msra.mxu0 %v772
    %v774 = vand.u32 %v471, 4294901760
    %v775 = vsub.f32 %v471, %v774
    %v776 = vand.u32 %v775, 4294901760
    %v777 = vsub.f32 %v775, %v776
    %v778 = vand.u32 %v777, 4294901760
    %779 = vmatpush.xpose.msra.mxu0 %v778
    %v780 = vand.u32 %v468, 4294901760
    %v781 = vsub.f32 %v468, %v780
    %v782 = vand.u32 %v781, 4294901760
    %v783 = vsub.f32 %v781, %v782
    %v784 = vand.u32 %v783, 4294901760
    %785 = vmatpush.xpose.msra.mxu0 %v784
    %v786 = vand.u32 %v465, 4294901760
    %v787 = vsub.f32 %v465, %v786
    %v788 = vand.u32 %v787, 4294901760
    %v789 = vsub.f32 %v787, %v788
    %v790 = vand.u32 %v789, 4294901760
    %791 = vmatpush.xpose.msra.mxu0 %v790
    %v792 = vand.u32 %v462, 4294901760
    %v793 = vsub.f32 %v462, %v792
    %v794 = vand.u32 %v793, 4294901760
    %v795 = vsub.f32 %v793, %v794
    %v796 = vand.u32 %v795, 4294901760
    %797 = vmatpush.xpose.msra.mxu0 %v796
    %v798 = vand.u32 %v459, 4294901760
    %v799 = vsub.f32 %v459, %v798
    %v800 = vand.u32 %v799, 4294901760
    %v801 = vsub.f32 %v799, %v800
    %v802 = vand.u32 %v801, 4294901760
    %803 = vmatpush.xpose.msra.mxu0 %v802
    %v804 = vand.u32 %v456, 4294901760
    %v805 = vsub.f32 %v456, %v804
    %v806 = vand.u32 %v805, 4294901760
    %v807 = vsub.f32 %v805, %v806
    %v808 = vand.u32 %v807, 4294901760
    %809 = vmatpush.xpose.msra.mxu0 %v808
    %v810 = vand.u32 %v719, 4294901760
    %811 = vmatmul.f32.gmra.mxu0 %v810
    %v812 = vpop.f32.mrf.mxu0
    %v813 = vadd.f32 %v752, %v812
    %814 = vdwg.mxu0
    %815 = vmatpush.xpose.msra.mxu0 0.0
    %816 = vmatpush.xpose.msra.mxu0 0.0
    %817 = vmatpush.xpose.msra.mxu0 0.0
    %818 = vmatpush.xpose.msra.mxu0 0.0
    %819 = vmatpush.xpose.msra.mxu0 0.0
    %820 = vmatpush.xpose.msra.mxu0 0.0
    %821 = vmatpush.xpose.msra.mxu0 0.0
    %822 = vmatpush.xpose.msra.mxu0 0.0
    %v823 = vand.u32 %v477, 4294901760
    %v824 = vsub.f32 %v477, %v823
    %825 = vmatpush.xpose.msra.mxu0 %v824
    %v826 = vand.u32 %v474, 4294901760
    %v827 = vsub.f32 %v474, %v826
    %828 = vmatpush.xpose.msra.mxu0 %v827
    %v829 = vand.u32 %v471, 4294901760
    %v830 = vsub.f32 %v471, %v829
    %831 = vmatpush.xpose.msra.mxu0 %v830
    %v832 = vand.u32 %v468, 4294901760
    %v833 = vsub.f32 %v468, %v832
    %834 = vmatpush.xpose.msra.mxu0 %v833
    %v835 = vand.u32 %v465, 4294901760
    %v836 = vsub.f32 %v465, %v835
    %837 = vmatpush.xpose.msra.mxu0 %v836
    %v838 = vand.u32 %v462, 4294901760
    %v839 = vsub.f32 %v462, %v838
    %840 = vmatpush.xpose.msra.mxu0 %v839
    %v841 = vand.u32 %v459, 4294901760
    %v842 = vsub.f32 %v459, %v841
    %843 = vmatpush.xpose.msra.mxu0 %v842
    %v844 = vand.u32 %v456, 4294901760
    %v845 = vsub.f32 %v456, %v844
    %846 = vmatpush.xpose.msra.mxu0 %v845
    %v847 = vand.u32 %v719, 4294901760
    %v848 = vsub.f32 %v719, %v847
    %849 = vmatmul.f32.gmra.mxu0 %v848
    %v850 = vpop.f32.mrf.mxu0
    %v851 = vadd.f32 %v813, %v850
    %852 = vdwg.mxu0
    %853 = vmatpush.xpose.msra.mxu0 0.0
    %854 = vmatpush.xpose.msra.mxu0 0.0
    %855 = vmatpush.xpose.msra.mxu0 0.0
    %856 = vmatpush.xpose.msra.mxu0 0.0
    %857 = vmatpush.xpose.msra.mxu0 0.0
    %858 = vmatpush.xpose.msra.mxu0 0.0
    %859 = vmatpush.xpose.msra.mxu0 0.0
    %860 = vmatpush.xpose.msra.mxu0 0.0
    %v861 = vand.u32 %v477, 4294901760
    %862 = vmatpush.xpose.msra.mxu0 %v861
    %v863 = vand.u32 %v474, 4294901760
    %864 = vmatpush.xpose.msra.mxu0 %v863
    %v865 = vand.u32 %v471, 4294901760
    %866 = vmatpush.xpose.msra.mxu0 %v865
    %v867 = vand.u32 %v468, 4294901760
    %868 = vmatpush.xpose.msra.mxu0 %v867
    %v869 = vand.u32 %v465, 4294901760
    %870 = vmatpush.xpose.msra.mxu0 %v869
    %v871 = vand.u32 %v462, 4294901760
    %872 = vmatpush.xpose.msra.mxu0 %v871
    %v873 = vand.u32 %v459, 4294901760
    %874 = vmatpush.xpose.msra.mxu0 %v873
    %v875 = vand.u32 %v456, 4294901760
    %876 = vmatpush.xpose.msra.mxu0 %v875
    %v877 = vand.u32 %v719, 4294901760
    %v878 = vsub.f32 %v719, %v877
    %v879 = vand.u32 %v878, 4294901760
    %880 = vmatmul.f32.gmra.mxu0 %v879
    %v881 = vpop.f32.mrf.mxu0
    %v882 = vadd.f32 %v851, %v881
    %883 = vdwg.mxu0
    %884 = vmatpush.xpose.msra.mxu0 0.0
    %885 = vmatpush.xpose.msra.mxu0 0.0
    %886 = vmatpush.xpose.msra.mxu0 0.0
    %887 = vmatpush.xpose.msra.mxu0 0.0
    %888 = vmatpush.xpose.msra.mxu0 0.0
    %889 = vmatpush.xpose.msra.mxu0 0.0
    %890 = vmatpush.xpose.msra.mxu0 0.0
    %891 = vmatpush.xpose.msra.mxu0 0.0
    %v892 = vand.u32 %v477, 4294901760
    %v893 = vsub.f32 %v477, %v892
    %v894 = vand.u32 %v893, 4294901760
    %895 = vmatpush.xpose.msra.mxu0 %v894
    %v896 = vand.u32 %v474, 4294901760
    %v897 = vsub.f32 %v474, %v896
    %v898 = vand.u32 %v897, 4294901760
    %899 = vmatpush.xpose.msra.mxu0 %v898
    %v900 = vand.u32 %v471, 4294901760
    %v901 = vsub.f32 %v471, %v900
    %v902 = vand.u32 %v901, 4294901760
    %903 = vmatpush.xpose.msra.mxu0 %v902
    %v904 = vand.u32 %v468, 4294901760
    %v905 = vsub.f32 %v468, %v904
    %v906 = vand.u32 %v905, 4294901760
    %907 = vmatpush.xpose.msra.mxu0 %v906
    %v908 = vand.u32 %v465, 4294901760
    %v909 = vsub.f32 %v465, %v908
    %v910 = vand.u32 %v909, 4294901760
    %911 = vmatpush.xpose.msra.mxu0 %v910
    %v912 = vand.u32 %v462, 4294901760
    %v913 = vsub.f32 %v462, %v912
    %v914 = vand.u32 %v913, 4294901760
    %915 = vmatpush.xpose.msra.mxu0 %v914
    %v916 = vand.u32 %v459, 4294901760
    %v917 = vsub.f32 %v459, %v916
    %v918 = vand.u32 %v917, 4294901760
    %919 = vmatpush.xpose.msra.mxu0 %v918
    %v920 = vand.u32 %v456, 4294901760
    %v921 = vsub.f32 %v456, %v920
    %v922 = vand.u32 %v921, 4294901760
    %923 = vmatpush.xpose.msra.mxu0 %v922
    %v924 = vand.u32 %v719, 4294901760
    %925 = vmatmul.f32.gmra.mxu0 %v924
    %v926 = vpop.f32.mrf.mxu0
    %v927 = vadd.f32 %v882, %v926
    %928 = vdwg.mxu0
    %929 = vmatpush.xpose.msra.mxu0 0.0
    %930 = vmatpush.xpose.msra.mxu0 0.0
    %931 = vmatpush.xpose.msra.mxu0 0.0
    %932 = vmatpush.xpose.msra.mxu0 0.0
    %933 = vmatpush.xpose.msra.mxu0 0.0
    %934 = vmatpush.xpose.msra.mxu0 0.0
    %935 = vmatpush.xpose.msra.mxu0 0.0
    %936 = vmatpush.xpose.msra.mxu0 0.0
    %v937 = vand.u32 %v477, 4294901760
    %938 = vmatpush.xpose.msra.mxu0 %v937
    %v939 = vand.u32 %v474, 4294901760
    %940 = vmatpush.xpose.msra.mxu0 %v939
    %v941 = vand.u32 %v471, 4294901760
    %942 = vmatpush.xpose.msra.mxu0 %v941
    %v943 = vand.u32 %v468, 4294901760
    %944 = vmatpush.xpose.msra.mxu0 %v943
    %v945 = vand.u32 %v465, 4294901760
    %946 = vmatpush.xpose.msra.mxu0 %v945
    %v947 = vand.u32 %v462, 4294901760
    %948 = vmatpush.xpose.msra.mxu0 %v947
    %v949 = vand.u32 %v459, 4294901760
    %950 = vmatpush.xpose.msra.mxu0 %v949
    %v951 = vand.u32 %v456, 4294901760
    %952 = vmatpush.xpose.msra.mxu0 %v951
    %v953 = vand.u32 %v719, 4294901760
    %954 = vmatmul.f32.gmra.mxu0 %v953
    %v955 = vpop.f32.mrf.mxu0
    %v956 = vadd.f32 %v927, %v955
    %957 = vdwg.mxu0
    %958 = vst.msk [vmem:[#allocation6] sm:$0xf] %vm441, %v956
    // Predicated region
    $region18: #{tpu_custom_call.1} parent=1 // pred_check
      _
    $region19: #{tpu_custom_call.1} parent=1 // pred_check_branch
      %960 = sbr.rel (0) target = $region21
    $region20: #{tpu_custom_call.1} parent=1 // pred_region
      %962 = vsyncadd [#allocation3], 0
      %s963 = sshll.u32 [#allocation2], 4
      %s964 = int_to_ptr.vmem [resolvable:$true] %s963
      %s965 = sshll.u32 %s4, 4
      %s966 = int_to_ptr.hbm [resolvable:$true] %s965
      %971 = dma.vmem_to_hbm [thread:$0]  %s964, 512, %s966, [#allocation3], 64, 64, 4
    $region21: #{tpu_custom_call.1} parent=1 // pred_fallthru
      _
    // Predicated region
    $region22: #{tpu_custom_call.1} parent=1 // pred_check
      _
    $region23: #{tpu_custom_call.1} parent=1 // pred_check_branch
      %973 = sbr.rel (0) target = $region25
    $region24: #{tpu_custom_call.1} parent=1 // pred_region
      %975 = vsyncadd [#allocation5], 0
      %s977 = sshll.u32 [#allocation4], 4
      %s978 = int_to_ptr.vmem [resolvable:$true] %s977
      %s979 = sshll.u32 %s5, 4
      %s980 = int_to_ptr.hbm [resolvable:$true] %s979
      %982 = dma.vmem_to_hbm [thread:$0]  %s978, 64, %s980, [#allocation5]
    $region25: #{tpu_custom_call.1} parent=1 // pred_fallthru
      _
    // Predicated region
    $region26: #{tpu_custom_call.1} parent=1 // pred_check
      _
    $region27: #{tpu_custom_call.1} parent=1 // pred_check_branch
      %984 = sbr.rel (0) target = $region29
    $region28: #{tpu_custom_call.1} parent=1 // pred_region
      %986 = vsyncadd [#allocation5], 0
      %s988 = sshll.u32 [#allocation6], 4
      %s989 = int_to_ptr.vmem [resolvable:$true] %s988
      %s990 = sshll.u32 %s6, 4
      %s991 = int_to_ptr.hbm [resolvable:$true] %s990
      %993 = dma.vmem_to_hbm [thread:$0]  %s989, 64, %s991, [#allocation5]
    $region29: #{tpu_custom_call.1} parent=1 // pred_fallthru
      _
    // Predicated region
    $region30: #{tpu_custom_call.1} parent=1 // pred_check
      _
    $region31: #{tpu_custom_call.1} parent=1 // pred_check_branch
      %995 = sbr.rel (0) target = $region33
    $region32: #{tpu_custom_call.1} parent=1 // pred_region
      %997 = dma.done [#allocation3], 512
    $region33: #{tpu_custom_call.1} parent=1 // pred_fallthru
      _
    // Predicated region
    $region34: #{tpu_custom_call.1} parent=1 // pred_check
      _
    $region35: #{tpu_custom_call.1} parent=1 // pred_check_branch
      %999 = sbr.rel (0) target = $region37
    $region36: #{tpu_custom_call.1} parent=1 // pred_region
      %1001 = dma.done [#allocation5], 64
    $region37: #{tpu_custom_call.1} parent=1 // pred_fallthru
      _
    // Predicated region
    $region38: #{tpu_custom_call.1} parent=1 // pred_check
      _
    $region39: #{tpu_custom_call.1} parent=1 // pred_check_branch
      %1003 = sbr.rel (0) target = $region41
    $region40: #{tpu_custom_call.1} parent=1 // pred_region
      %1005 = dma.done [#allocation5], 64
    $region41: #{tpu_custom_call.1} parent=1 // pred_fallthru
      _
    %1006 = vsyncpa [#allocation3], 1
    %1007 = vsyncpa [#allocation5], 1

// kernel: tpu_custom_call.1
$region0: #{tpu_custom_call.1}
  #allocation0 [shape = 'u32[]', space=smem, size = 0x4, offset = 0x4, fixed_abs, tag = 'smem constant byte address 0x4 - core index']
  #allocation1 [shape = 'u32[72,128]{1,0:T(1,128)}', space=vmem, size = 0x9000, scoped, tag = 'internal scratch']
  %s0 = inlined_call_operand.vmem [shape: f32[64,16], index: 0, kind: input, shape index: {}]
  %s1 = inlined_call_operand.vmem [shape: f32[16,64], index: 1, kind: input, shape index: {}]
  %s2 = inlined_call_operand.vmem [shape: f32[4,64], index: 2, kind: input, shape index: {}]
  %s3 = inlined_call_operand.vmem [shape: f32[4,64], index: 3, kind: input, shape index: {}]
  %s4 = inlined_call_operand.hbm [shape: bf16[64,64], index: 4, kind: output, shape index: {0}]
  %s5 = inlined_call_operand.hbm [shape: f32[4,64], index: 5, kind: output, shape index: {1}]
  %s6 = inlined_call_operand.hbm [shape: f32[4,64], index: 6, kind: output, shape index: {2}]
  %7 = xla_tuple %s4, %s5, %s6
  %s8 = sld [smem:[#allocation0]]
  $region42: #{tpu_custom_call.1} parent=0
    _
  %s10 = ssub.s32 1, %s8
  %s11 = scalar_select 0, %s10, %s8
  $region1: #{tpu_custom_call.1} parent=0
    #allocation2 [shape = 'u8[16384]{0}', space=vmem, size = 0x4000, scoped, tag = 'output window, operand 0, single buffered']
    #allocation3 [shape = 's32[1]{0}', space=sflag, size = 0x4, scoped, tag = 'scoped memory for tpu_custom_call.1']
    #allocation4 [shape = 'u8[2048]{0}', space=vmem, size = 0x800, scoped, tag = 'output window, operand 1, single buffered']
    #allocation5 [shape = 's32[1]{0}', space=sflag, size = 0x4, scoped, tag = 'scoped memory for tpu_custom_call.1']
    #allocation6 [shape = 'u8[2048]{0}', space=vmem, size = 0x800, scoped, tag = 'output window, operand 2, single buffered']
    %12 = vsyncpa [#allocation3], 0
    %13 = vsyncpa [#allocation5], 0
    // Predicated region
    $region2: #{tpu_custom_call.1} parent=1 // pred_check
      _
    $region3: #{tpu_custom_call.1} parent=1 // pred_check_branch
      %15 = sbr.rel (0) target = $region5
    $region4: #{tpu_custom_call.1} parent=1 // pred_region
      _
    $region5: #{tpu_custom_call.1} parent=1 // pred_fallthru
      _
    // Predicated region
    $region6: #{tpu_custom_call.1} parent=1 // pred_check
      _
    $region7: #{tpu_custom_call.1} parent=1 // pred_check_branch
      %17 = sbr.rel (0) target = $region9
    $region8: #{tpu_custom_call.1} parent=1 // pred_region
      _
    $region9: #{tpu_custom_call.1} parent=1 // pred_fallthru
      _
    // Predicated region
    $region10: #{tpu_custom_call.1} parent=1 // pred_check
      _
    $region11: #{tpu_custom_call.1} parent=1 // pred_check_branch
      %19 = sbr.rel (0) target = $region13
    $region12: #{tpu_custom_call.1} parent=1 // pred_region
      _
    $region13: #{tpu_custom_call.1} parent=1 // pred_fallthru
      _
    // Predicated region
    $region14: #{tpu_custom_call.1} parent=1 // pred_check
      _
    $region15: #{tpu_custom_call.1} parent=1 // pred_check_branch
      %21 = sbr.rel (0) target = $region17
    $region16: #{tpu_custom_call.1} parent=1 // pred_region
      _
    $region17: #{tpu_custom_call.1} parent=1 // pred_fallthru
      _
    %v22 = vld [vmem:[%s0] sm:$0xff]
    %v23 = vld [vmem:[%s0 + $0x8] sm:$0xff]
    %v24 = vld [vmem:[%s0 + $0x10] sm:$0xff]
    %v25 = vld [vmem:[%s0 + $0x18] sm:$0xff]
    %v26 = vld [vmem:[%s0 + $0x20] sm:$0xff]
    %v27 = vld [vmem:[%s0 + $0x28] sm:$0xff]
    %v28 = vld [vmem:[%s0 + $0x30] sm:$0xff]
    %v29 = vld [vmem:[%s0 + $0x38] sm:$0xff]
    %v30 = vld [vmem:[%s1] sm:$0xff]
    %v31 = vld [vmem:[%s1 + $0x8] sm:$0xff]
    %vm32 = vcmask 130048
    %v34 = vsel %vm32, %v22, 0
    %v37 = vsel %vm32, %v23, 0
    %v40 = vsel %vm32, %v24, 0
    %v43 = vsel %vm32, %v25, 0
    %v46 = vsel %vm32, %v26, 0
    %v49 = vsel %vm32, %v27, 0
    %v52 = vsel %vm32, %v28, 0
    %v55 = vsel %vm32, %v29, 0
    %57 = vmatpush.msra.mxu0 0.0
    %58 = vmatpush.msra.mxu0 0.0
    %59 = vmatpush.msra.mxu0 0.0
    %60 = vmatpush.msra.mxu0 0.0
    %61 = vmatpush.msra.mxu0 0.0
    %62 = vmatpush.msra.mxu0 0.0
    %63 = vmatpush.msra.mxu0 0.0
    %64 = vmatpush.msra.mxu0 0.0
    %65 = vmatpush.msra.mxu0 0.0
    %66 = vmatpush.msra.mxu0 0.0
    %67 = vmatpush.msra.mxu0 0.0
    %68 = vmatpush.msra.mxu0 0.0
    %69 = vmatpush.msra.mxu0 0.0
    %70 = vmatpush.msra.mxu0 0.0
    %v71 = vand.u32 %v31, 4294901760
    %72 = vmatpush.msra.mxu0 %v71
    %v73 = vand.u32 %v30, 4294901760
    %74 = vmatpush.msra.mxu0 %v73
    %v75 = vand.u32 %v34, 4294901760
    %v76 = vsub.f32 %v34, %v75
    %v77 = vand.u32 %v76, 4294901760
    %v78 = vsub.f32 %v76, %v77
    %v79 = vand.u32 %v78, 4294901760
    %80 = vmatmul.f32.gmra.mxu0 %v79
    %v81 = vpop.f32.mrf.mxu0
    %v82 = vadd.f32 0.0, %v81
    %v83 = vand.u32 %v37, 4294901760
    %v84 = vsub.f32 %v37, %v83
    %v85 = vand.u32 %v84, 4294901760
    %v86 = vsub.f32 %v84, %v85
    %v87 = vand.u32 %v86, 4294901760
    %88 = vmatmul.f32.gmra.mxu0 %v87
    %v89 = vpop.f32.mrf.mxu0
    %v90 = vadd.f32 0.0, %v89
    %v91 = vand.u32 %v40, 4294901760
    %v92 = vsub.f32 %v40, %v91
    %v93 = vand.u32 %v92, 4294901760
    %v94 = vsub.f32 %v92, %v93
    %v95 = vand.u32 %v94, 4294901760
    %96 = vmatmul.f32.gmra.mxu0 %v95
    %v97 = vpop.f32.mrf.mxu0
    %v98 = vadd.f32 0.0, %v97
    %v99 = vand.u32 %v43, 4294901760
    %v100 = vsub.f32 %v43, %v99
    %v101 = vand.u32 %v100, 4294901760
    %v102 = vsub.f32 %v100, %v101
    %v103 = vand.u32 %v102, 4294901760
    %104 = vmatmul.f32.gmra.mxu0 %v103
    %v105 = vpop.f32.mrf.mxu0
    %v106 = vadd.f32 0.0, %v105
    %v107 = vand.u32 %v46, 4294901760
    %v108 = vsub.f32 %v46, %v107
    %v109 = vand.u32 %v108, 4294901760
    %v110 = vsub.f32 %v108, %v109
    %v111 = vand.u32 %v110, 4294901760
    %112 = vmatmul.f32.gmra.mxu0 %v111
    %v113 = vpop.f32.mrf.mxu0
    %v114 = vadd.f32 0.0, %v113
    %v115 = vand.u32 %v49, 4294901760
    %v116 = vsub.f32 %v49, %v115
    %v117 = vand.u32 %v116, 4294901760
    %v118 = vsub.f32 %v116, %v117
    %v119 = vand.u32 %v118, 4294901760
    %120 = vmatmul.f32.gmra.mxu0 %v119
    %v121 = vpop.f32.mrf.mxu0
    %v122 = vadd.f32 0.0, %v121
    %v123 = vand.u32 %v52, 4294901760
    %v124 = vsub.f32 %v52, %v123
    %v125 = vand.u32 %v124, 4294901760
    %v126 = vsub.f32 %v124, %v125
    %v127 = vand.u32 %v126, 4294901760
    %128 = vmatmul.f32.gmra.mxu0 %v127
    %v129 = vpop.f32.mrf.mxu0
    %v130 = vadd.f32 0.0, %v129
    %v131 = vand.u32 %v55, 4294901760
    %v132 = vsub.f32 %v55, %v131
    %v133 = vand.u32 %v132, 4294901760
    %v134 = vsub.f32 %v132, %v133
    %v135 = vand.u32 %v134, 4294901760
    %136 = vmatmul.f32.gmra.mxu0 %v135
    %v137 = vpop.f32.mrf.mxu0
    %v138 = vadd.f32 0.0, %v137
    %139 = vdwg.mxu0
    %140 = vmatpush.msra.mxu0 0.0
    %141 = vmatpush.msra.mxu0 0.0
    %142 = vmatpush.msra.mxu0 0.0
    %143 = vmatpush.msra.mxu0 0.0
    %144 = vmatpush.msra.mxu0 0.0
    %145 = vmatpush.msra.mxu0 0.0
    %146 = vmatpush.msra.mxu0 0.0
    %147 = vmatpush.msra.mxu0 0.0
    %148 = vmatpush.msra.mxu0 0.0
    %149 = vmatpush.msra.mxu0 0.0
    %150 = vmatpush.msra.mxu0 0.0
    %151 = vmatpush.msra.mxu0 0.0
    %152 = vmatpush.msra.mxu0 0.0
    %153 = vmatpush.msra.mxu0 0.0
    %v154 = vand.u32 %v31, 4294901760
    %v155 = vsub.f32 %v31, %v154
    %v156 = vand.u32 %v155, 4294901760
    %v157 = vsub.f32 %v155, %v156
    %v158 = vand.u32 %v157, 4294901760
    %159 = vmatpush.msra.mxu0 %v158
    %v160 = vand.u32 %v30, 4294901760
    %v161 = vsub.f32 %v30, %v160
    %v162 = vand.u32 %v161, 4294901760
    %v163 = vsub.f32 %v161, %v162
    %v164 = vand.u32 %v163, 4294901760
    %165 = vmatpush.msra.mxu0 %v164
    %v166 = vand.u32 %v34, 4294901760
    %167 = vmatmul.f32.gmra.mxu0 %v166
    %v168 = vpop.f32.mrf.mxu0
    %v169 = vadd.f32 %v82, %v168
    %v170 = vand.u32 %v37, 4294901760
    %171 = vmatmul.f32.gmra.mxu0 %v170
    %v172 = vpop.f32.mrf.mxu0
    %v173 = vadd.f32 %v90, %v172
    %v174 = vand.u32 %v40, 4294901760
    %175 = vmatmul.f32.gmra.mxu0 %v174
    %v176 = vpop.f32.mrf.mxu0
    %v177 = vadd.f32 %v98, %v176
    %v178 = vand.u32 %v43, 4294901760
    %179 = vmatmul.f32.gmra.mxu0 %v178
    %v180 = vpop.f32.mrf.mxu0
    %v181 = vadd.f32 %v106, %v180
    %v182 = vand.u32 %v46, 4294901760
    %183 = vmatmul.f32.gmra.mxu0 %v182
    %v184 = vpop.f32.mrf.mxu0
    %v185 = vadd.f32 %v114, %v184
    %v186 = vand.u32 %v49, 4294901760
    %187 = vmatmul.f32.gmra.mxu0 %v186
    %v188 = vpop.f32.mrf.mxu0
    %v189 = vadd.f32 %v122, %v188
    %v190 = vand.u32 %v52, 4294901760
    %191 = vmatmul.f32.gmra.mxu0 %v190
    %v192 = vpop.f32.mrf.mxu0
    %v193 = vadd.f32 %v130, %v192
    %v194 = vand.u32 %v55, 4294901760
    %195 = vmatmul.f32.gmra.mxu0 %v194
    %v196 = vpop.f32.mrf.mxu0
    %v197 = vadd.f32 %v138, %v196
    %198 = vdwg.mxu0
    %199 = vmatpush.msra.mxu0 0.0
    %200 = vmatpush.msra.mxu0 0.0
    %201 = vmatpush.msra.mxu0 0.0
    %202 = vmatpush.msra.mxu0 0.0
    %203 = vmatpush.msra.mxu0 0.0
    %204 = vmatpush.msra.mxu0 0.0
    %205 = vmatpush.msra.mxu0 0.0
    %206 = vmatpush.msra.mxu0 0.0
    %207 = vmatpush.msra.mxu0 0.0
    %208 = vmatpush.msra.mxu0 0.0
    %209 = vmatpush.msra.mxu0 0.0
    %210 = vmatpush.msra.mxu0 0.0
    %211 = vmatpush.msra.mxu0 0.0
    %212 = vmatpush.msra.mxu0 0.0
    %v213 = vand.u32 %v31, 4294901760
    %v214 = vsub.f32 %v31, %v213
    %215 = vmatpush.msra.mxu0 %v214
    %v216 = vand.u32 %v30, 4294901760
    %v217 = vsub.f32 %v30, %v216
    %218 = vmatpush.msra.mxu0 %v217
    %v219 = vand.u32 %v34, 4294901760
    %v220 = vsub.f32 %v34, %v219
    %221 = vmatmul.f32.gmra.mxu0 %v220
    %v222 = vpop.f32.mrf.mxu0
    %v223 = vadd.f32 %v169, %v222
    %v224 = vand.u32 %v37, 4294901760
    %v225 = vsub.f32 %v37, %v224
    %226 = vmatmul.f32.gmra.mxu0 %v225
    %v227 = vpop.f32.mrf.mxu0
    %v228 = vadd.f32 %v173, %v227
    %v229 = vand.u32 %v40, 4294901760
    %v230 = vsub.f32 %v40, %v229
    %231 = vmatmul.f32.gmra.mxu0 %v230
    %v232 = vpop.f32.mrf.mxu0
    %v233 = vadd.f32 %v177, %v232
    %v234 = vand.u32 %v43, 4294901760
    %v235 = vsub.f32 %v43, %v234
    %236 = vmatmul.f32.gmra.mxu0 %v235
    %v237 = vpop.f32.mrf.mxu0
    %v238 = vadd.f32 %v181, %v237
    %v239 = vand.u32 %v46, 4294901760
    %v240 = vsub.f32 %v46, %v239
    %241 = vmatmul.f32.gmra.mxu0 %v240
    %v242 = vpop.f32.mrf.mxu0
    %v243 = vadd.f32 %v185, %v242
    %v244 = vand.u32 %v49, 4294901760
    %v245 = vsub.f32 %v49, %v244
    %246 = vmatmul.f32.gmra.mxu0 %v245
    %v247 = vpop.f32.mrf.mxu0
    %v248 = vadd.f32 %v189, %v247
    %v249 = vand.u32 %v52, 4294901760
    %v250 = vsub.f32 %v52, %v249
    %251 = vmatmul.f32.gmra.mxu0 %v250
    %v252 = vpop.f32.mrf.mxu0
    %v253 = vadd.f32 %v193, %v252
    %v254 = vand.u32 %v55, 4294901760
    %v255 = vsub.f32 %v55, %v254
    %256 = vmatmul.f32.gmra.mxu0 %v255
    %v257 = vpop.f32.mrf.mxu0
    %v258 = vadd.f32 %v197, %v257
    %259 = vdwg.mxu0
    %260 = vmatpush.msra.mxu0 0.0
    %261 = vmatpush.msra.mxu0 0.0
    %262 = vmatpush.msra.mxu0 0.0
    %263 = vmatpush.msra.mxu0 0.0
    %264 = vmatpush.msra.mxu0 0.0
    %265 = vmatpush.msra.mxu0 0.0
    %266 = vmatpush.msra.mxu0 0.0
    %267 = vmatpush.msra.mxu0 0.0
    %268 = vmatpush.msra.mxu0 0.0
    %269 = vmatpush.msra.mxu0 0.0
    %270 = vmatpush.msra.mxu0 0.0
    %271 = vmatpush.msra.mxu0 0.0
    %272 = vmatpush.msra.mxu0 0.0
    %273 = vmatpush.msra.mxu0 0.0
    %v274 = vand.u32 %v31, 4294901760
    %275 = vmatpush.msra.mxu0 %v274
    %v276 = vand.u32 %v30, 4294901760
    %277 = vmatpush.msra.mxu0 %v276
    %v278 = vand.u32 %v34, 4294901760
    %v279 = vsub.f32 %v34, %v278
    %v280 = vand.u32 %v279, 4294901760
    %281 = vmatmul.f32.gmra.mxu0 %v280
    %v282 = vpop.f32.mrf.mxu0
    %v283 = vadd.f32 %v223, %v282
    %v284 = vand.u32 %v37, 4294901760
    %v285 = vsub.f32 %v37, %v284
    %v286 = vand.u32 %v285, 4294901760
    %287 = vmatmul.f32.gmra.mxu0 %v286
    %v288 = vpop.f32.mrf.mxu0
    %v289 = vadd.f32 %v228, %v288
    %v290 = vand.u32 %v40, 4294901760
    %v291 = vsub.f32 %v40, %v290
    %v292 = vand.u32 %v291, 4294901760
    %293 = vmatmul.f32.gmra.mxu0 %v292
    %v294 = vpop.f32.mrf.mxu0
    %v295 = vadd.f32 %v233, %v294
    %v296 = vand.u32 %v43, 4294901760
    %v297 = vsub.f32 %v43, %v296
    %v298 = vand.u32 %v297, 4294901760
    %299 = vmatmul.f32.gmra.mxu0 %v298
    %v300 = vpop.f32.mrf.mxu0
    %v301 = vadd.f32 %v238, %v300
    %v302 = vand.u32 %v46, 4294901760
    %v303 = vsub.f32 %v46, %v302
    %v304 = vand.u32 %v303, 4294901760
    %305 = vmatmul.f32.gmra.mxu0 %v304
    %v306 = vpop.f32.mrf.mxu0
    %v307 = vadd.f32 %v243, %v306
    %v308 = vand.u32 %v49, 4294901760
    %v309 = vsub.f32 %v49, %v308
    %v310 = vand.u32 %v309, 4294901760
    %311 = vmatmul.f32.gmra.mxu0 %v310
    %v312 = vpop.f32.mrf.mxu0
    %v313 = vadd.f32 %v248, %v312
    %v314 = vand.u32 %v52, 4294901760
    %v315 = vsub.f32 %v52, %v314
    %v316 = vand.u32 %v315, 4294901760
    %317 = vmatmul.f32.gmra.mxu0 %v316
    %v318 = vpop.f32.mrf.mxu0
    %v319 = vadd.f32 %v253, %v318
    %v320 = vand.u32 %v55, 4294901760
    %v321 = vsub.f32 %v55, %v320
    %v322 = vand.u32 %v321, 4294901760
    %323 = vmatmul.f32.gmra.mxu0 %v322
    %v324 = vpop.f32.mrf.mxu0
    %v325 = vadd.f32 %v258, %v324
    %326 = vdwg.mxu0
    %327 = vmatpush.msra.mxu0 0.0
    %328 = vmatpush.msra.mxu0 0.0
    %329 = vmatpush.msra.mxu0 0.0
    %330 = vmatpush.msra.mxu0 0.0
    %331 = vmatpush.msra.mxu0 0.0
    %332 = vmatpush.msra.mxu0 0.0
    %333 = vmatpush.msra.mxu0 0.0
    %334 = vmatpush.msra.mxu0 0.0
    %335 = vmatpush.msra.mxu0 0.0
    %336 = vmatpush.msra.mxu0 0.0
    %337 = vmatpush.msra.mxu0 0.0
    %338 = vmatpush.msra.mxu0 0.0
    %339 = vmatpush.msra.mxu0 0.0
    %340 = vmatpush.msra.mxu0 0.0
    %v341 = vand.u32 %v31, 4294901760
    %v342 = vsub.f32 %v31, %v341
    %v343 = vand.u32 %v342, 4294901760
    %344 = vmatpush.msra.mxu0 %v343
    %v345 = vand.u32 %v30, 4294901760
    %v346 = vsub.f32 %v30, %v345
    %v347 = vand.u32 %v346, 4294901760
    %348 = vmatpush.msra.mxu0 %v347
    %v349 = vand.u32 %v34, 4294901760
    %350 = vmatmul.f32.gmra.mxu0 %v349
    %v351 = vpop.f32.mrf.mxu0
    %v352 = vadd.f32 %v283, %v351
    %v353 = vand.u32 %v37, 4294901760
    %354 = vmatmul.f32.gmra.mxu0 %v353
    %v355 = vpop.f32.mrf.mxu0
    %v356 = vadd.f32 %v289, %v355
    %v357 = vand.u32 %v40, 4294901760
    %358 = vmatmul.f32.gmra.mxu0 %v357
    %v359 = vpop.f32.mrf.mxu0
    %v360 = vadd.f32 %v295, %v359
    %v361 = vand.u32 %v43, 4294901760
    %362 = vmatmul.f32.gmra.mxu0 %v361
    %v363 = vpop.f32.mrf.mxu0
    %v364 = vadd.f32 %v301, %v363
    %v365 = vand.u32 %v46, 4294901760
    %366 = vmatmul.f32.gmra.mxu0 %v365
    %v367 = vpop.f32.mrf.mxu0
    %v368 = vadd.f32 %v307, %v367
    %v369 = vand.u32 %v49, 4294901760
    %370 = vmatmul.f32.gmra.mxu0 %v369
    %v371 = vpop.f32.mrf.mxu0
    %v372 = vadd.f32 %v313, %v371
    %v373 = vand.u32 %v52, 4294901760
    %374 = vmatmul.f32.gmra.mxu0 %v373
    %v375 = vpop.f32.mrf.mxu0
    %v376 = vadd.f32 %v319, %v375
    %v377 = vand.u32 %v55, 4294901760
    %378 = vmatmul.f32.gmra.mxu0 %v377
    %v379 = vpop.f32.mrf.mxu0
    %v380 = vadd.f32 %v325, %v379
    %381 = vdwg.mxu0
    %382 = vmatpush.msra.mxu0 0.0
    %383 = vmatpush.msra.mxu0 0.0
    %384 = vmatpush.msra.mxu0 0.0
    %385 = vmatpush.msra.mxu0 0.0
    %386 = vmatpush.msra.mxu0 0.0
    %387 = vmatpush.msra.mxu0 0.0
    %388 = vmatpush.msra.mxu0 0.0
    %389 = vmatpush.msra.mxu0 0.0
    %390 = vmatpush.msra.mxu0 0.0
    %391 = vmatpush.msra.mxu0 0.0
    %392 = vmatpush.msra.mxu0 0.0
    %393 = vmatpush.msra.mxu0 0.0
    %394 = vmatpush.msra.mxu0 0.0
    %395 = vmatpush.msra.mxu0 0.0
    %v396 = vand.u32 %v31, 4294901760
    %397 = vmatpush.msra.mxu0 %v396
    %v398 = vand.u32 %v30, 4294901760
    %399 = vmatpush.msra.mxu0 %v398
    %v400 = vand.u32 %v34, 4294901760
    %401 = vmatmul.f32.gmra.mxu0 %v400
    %v402 = vpop.f32.mrf.mxu0
    %v403 = vadd.f32 %v352, %v402
    %v404 = vand.u32 %v37, 4294901760
    %405 = vmatmul.f32.gmra.mxu0 %v404
    %v406 = vpop.f32.mrf.mxu0
    %v407 = vadd.f32 %v356, %v406
    %v408 = vand.u32 %v40, 4294901760
    %409 = vmatmul.f32.gmra.mxu0 %v408
    %v410 = vpop.f32.mrf.mxu0
    %v411 = vadd.f32 %v360, %v410
    %v412 = vand.u32 %v43, 4294901760
    %413 = vmatmul.f32.gmra.mxu0 %v412
    %v414 = vpop.f32.mrf.mxu0
    %v415 = vadd.f32 %v364, %v414
    %v416 = vand.u32 %v46, 4294901760
    %417 = vmatmul.f32.gmra.mxu0 %v416
    %v418 = vpop.f32.mrf.mxu0
    %v419 = vadd.f32 %v368, %v418
    %v420 = vand.u32 %v49, 4294901760
    %421 = vmatmul.f32.gmra.mxu0 %v420
    %v422 = vpop.f32.mrf.mxu0
    %v423 = vadd.f32 %v372, %v422
    %v424 = vand.u32 %v52, 4294901760
    %425 = vmatmul.f32.gmra.mxu0 %v424
    %v426 = vpop.f32.mrf.mxu0
    %v427 = vadd.f32 %v376, %v426
    %v428 = vand.u32 %v55, 4294901760
    %429 = vmatmul.f32.gmra.mxu0 %v428
    %v430 = vpop.f32.mrf.mxu0
    %v431 = vadd.f32 %v380, %v430
    %432 = vdwg.mxu0
    %v433 = vpack.c.bf16 %v403, %v403
    %v434 = vpack.c.bf16 %v407, %v407
    %v435 = vpack.c.bf16 %v411, %v411
    %v436 = vpack.c.bf16 %v415, %v415
    %v437 = vpack.c.bf16 %v419, %v419
    %v438 = vpack.c.bf16 %v423, %v423
    %v439 = vpack.c.bf16 %v427, %v427
    %v440 = vpack.c.bf16 %v431, %v431
    %vm441 = vcmask 519168
    %442 = vst.msk [vmem:[#allocation2] sm:$0xf] %vm441, %v433
    %443 = vst.msk [vmem:[#allocation2 + $0x4] sm:$0xf] %vm441, %v434
    %444 = vst.msk [vmem:[#allocation2 + $0x8] sm:$0xf] %vm441, %v435
    %445 = vst.msk [vmem:[#allocation2 + $0xc] sm:$0xf] %vm441, %v436
    %446 = vst.msk [vmem:[#allocation2 + $0x10] sm:$0xf] %vm441, %v437
    %447 = vst.msk [vmem:[#allocation2 + $0x14] sm:$0xf] %vm441, %v438
    %448 = vst.msk [vmem:[#allocation2 + $0x18] sm:$0xf] %vm441, %v439
    %449 = vst.msk [vmem:[#allocation2 + $0x1c] sm:$0xf] %vm441, %v440
    %v450 = vld [vmem:[%s2] sm:$0xf]
    %vm451 = vcmask 523264
    %v453 = vsel %vm451, %v450, 0
    %v456 = vsel %vm451, %v403, 0
    %v459 = vsel %vm451, %v407, 0
    %v462 = vsel %vm451, %v411, 0
    %v465 = vsel %vm451, %v415, 0
    %v468 = vsel %vm451, %v419, 0
    %v471 = vsel %vm451, %v423, 0
    %v474 = vsel %vm451, %v427, 0
    %v477 = vsel %vm451, %v431, 0
    %479 = vmatpush.xpose.msra.mxu0 0.0
    %480 = vmatpush.xpose.msra.mxu0 0.0
    %481 = vmatpush.xpose.msra.mxu0 0.0
    %482 = vmatpush.xpose.msra.mxu0 0.0
    %483 = vmatpush.xpose.msra.mxu0 0.0
    %484 = vmatpush.xpose.msra.mxu0 0.0
    %485 = vmatpush.xpose.msra.mxu0 0.0
    %486 = vmatpush.xpose.msra.mxu0 0.0
    %v487 = vand.u32 %v477, 4294901760
    %488 = vmatpush.xpose.msra.mxu0 %v487
    %v489 = vand.u32 %v474, 4294901760
    %490 = vmatpush.xpose.msra.mxu0 %v489
    %v491 = vand.u32 %v471, 4294901760
    %492 = vmatpush.xpose.msra.mxu0 %v491
    %v493 = vand.u32 %v468, 4294901760
    %494 = vmatpush.xpose.msra.mxu0 %v493
    %v495 = vand.u32 %v465, 4294901760
    %496 = vmatpush.xpose.msra.mxu0 %v495
    %v497 = vand.u32 %v462, 4294901760
    %498 = vmatpush.xpose.msra.mxu0 %v497
    %v499 = vand.u32 %v459, 4294901760
    %500 = vmatpush.xpose.msra.mxu0 %v499
    %v501 = vand.u32 %v456, 4294901760
    %502 = vmatpush.xpose.msra.mxu0 %v501
    %v503 = vand.u32 %v453, 4294901760
    %v504 = vsub.f32 %v453, %v503
    %v505 = vand.u32 %v504, 4294901760
    %v506 = vsub.f32 %v504, %v505
    %v507 = vand.u32 %v506, 4294901760
    %508 = vmatmul.f32.gmra.mxu0 %v507
    %v509 = vpop.f32.mrf.mxu0
    %v510 = vadd.f32 0.0, %v509
    %511 = vdwg.mxu0
    %512 = vmatpush.xpose.msra.mxu0 0.0
    %513 = vmatpush.xpose.msra.mxu0 0.0
    %514 = vmatpush.xpose.msra.mxu0 0.0
    %515 = vmatpush.xpose.msra.mxu0 0.0
    %516 = vmatpush.xpose.msra.mxu0 0.0
    %517 = vmatpush.xpose.msra.mxu0 0.0
    %518 = vmatpush.xpose.msra.mxu0 0.0
    %519 = vmatpush.xpose.msra.mxu0 0.0
    %v520 = vand.u32 %v477, 4294901760
    %v521 = vsub.f32 %v477, %v520
    %v522 = vand.u32 %v521, 4294901760
    %v523 = vsub.f32 %v521, %v522
    %v524 = vand.u32 %v523, 4294901760
    %525 = vmatpush.xpose.msra.mxu0 %v524
    %v526 = vand.u32 %v474, 4294901760
    %v527 = vsub.f32 %v474, %v526
    %v528 = vand.u32 %v527, 4294901760
    %v529 = vsub.f32 %v527, %v528
    %v530 = vand.u32 %v529, 4294901760
    %531 = vmatpush.xpose.msra.mxu0 %v530
    %v532 = vand.u32 %v471, 4294901760
    %v533 = vsub.f32 %v471, %v532
    %v534 = vand.u32 %v533, 4294901760
    %v535 = vsub.f32 %v533, %v534
    %v536 = vand.u32 %v535, 4294901760
    %537 = vmatpush.xpose.msra.mxu0 %v536
    %v538 = vand.u32 %v468, 4294901760
    %v539 = vsub.f32 %v468, %v538
    %v540 = vand.u32 %v539, 4294901760
    %v541 = vsub.f32 %v539, %v540
    %v542 = vand.u32 %v541, 4294901760
    %543 = vmatpush.xpose.msra.mxu0 %v542
    %v544 = vand.u32 %v465, 4294901760
    %v545 = vsub.f32 %v465, %v544
    %v546 = vand.u32 %v545, 4294901760
    %v547 = vsub.f32 %v545, %v546
    %v548 = vand.u32 %v547, 4294901760
    %549 = vmatpush.xpose.msra.mxu0 %v548
    %v550 = vand.u32 %v462, 4294901760
    %v551 = vsub.f32 %v462, %v550
    %v552 = vand.u32 %v551, 4294901760
    %v553 = vsub.f32 %v551, %v552
    %v554 = vand.u32 %v553, 4294901760
    %555 = vmatpush.xpose.msra.mxu0 %v554
    %v556 = vand.u32 %v459, 4294901760
    %v557 = vsub.f32 %v459, %v556
    %v558 = vand.u32 %v557, 4294901760
    %v559 = vsub.f32 %v557, %v558
    %v560 = vand.u32 %v559, 4294901760
    %561 = vmatpush.xpose.msra.mxu0 %v560
    %v562 = vand.u32 %v456, 4294901760
    %v563 = vsub.f32 %v456, %v562
    %v564 = vand.u32 %v563, 4294901760
    %v565 = vsub.f32 %v563, %v564
    %v566 = vand.u32 %v565, 4294901760
    %567 = vmatpush.xpose.msra.mxu0 %v566
    %v568 = vand.u32 %v453, 4294901760
    %569 = vmatmul.f32.gmra.mxu0 %v568
    %v570 = vpop.f32.mrf.mxu0
    %v571 = vadd.f32 %v510, %v570
    %572 = vdwg.mxu0
    %573 = vmatpush.xpose.msra.mxu0 0.0
    %574 = vmatpush.xpose.msra.mxu0 0.0
    %575 = vmatpush.xpose.msra.mxu0 0.0
    %576 = vmatpush.xpose.msra.mxu0 0.0
    %577 = vmatpush.xpose.msra.mxu0 0.0
    %578 = vmatpush.xpose.msra.mxu0 0.0
    %579 = vmatpush.xpose.msra.mxu0 0.0
    %580 = vmatpush.xpose.msra.mxu0 0.0
    %v581 = vand.u32 %v477, 4294901760
    %v582 = vsub.f32 %v477, %v581
    %583 = vmatpush.xpose.msra.mxu0 %v582
    %v584 = vand.u32 %v474, 4294901760
    %v585 = vsub.f32 %v474, %v584
    %586 = vmatpush.xpose.msra.mxu0 %v585
    %v587 = vand.u32 %v471, 4294901760
    %v588 = vsub.f32 %v471, %v587
    %589 = vmatpush.xpose.msra.mxu0 %v588
    %v590 = vand.u32 %v468, 4294901760
    %v591 = vsub.f32 %v468, %v590
    %592 = vmatpush.xpose.msra.mxu0 %v591
    %v593 = vand.u32 %v465, 4294901760
    %v594 = vsub.f32 %v465, %v593
    %595 = vmatpush.xpose.msra.mxu0 %v594
    %v596 = vand.u32 %v462, 4294901760
    %v597 = vsub.f32 %v462, %v596
    %598 = vmatpush.xpose.msra.mxu0 %v597
    %v599 = vand.u32 %v459, 4294901760
    %v600 = vsub.f32 %v459, %v599
    %601 = vmatpush.xpose.msra.mxu0 %v600
    %v602 = vand.u32 %v456, 4294901760
    %v603 = vsub.f32 %v456, %v602
    %604 = vmatpush.xpose.msra.mxu0 %v603
    %v605 = vand.u32 %v453, 4294901760
    %v606 = vsub.f32 %v453, %v605
    %607 = vmatmul.f32.gmra.mxu0 %v606
    %v608 = vpop.f32.mrf.mxu0
    %v609 = vadd.f32 %v571, %v608
    %610 = vdwg.mxu0
    %611 = vmatpush.xpose.msra.mxu0 0.0
    %612 = vmatpush.xpose.msra.mxu0 0.0
    %613 = vmatpush.xpose.msra.mxu0 0.0
    %614 = vmatpush.xpose.msra.mxu0 0.0
    %615 = vmatpush.xpose.msra.mxu0 0.0
    %616 = vmatpush.xpose.msra.mxu0 0.0
    %617 = vmatpush.xpose.msra.mxu0 0.0
    %618 = vmatpush.xpose.msra.mxu0 0.0
    %v619 = vand.u32 %v477, 4294901760
    %620 = vmatpush.xpose.msra.mxu0 %v619
    %v621 = vand.u32 %v474, 4294901760
    %622 = vmatpush.xpose.msra.mxu0 %v621
    %v623 = vand.u32 %v471, 4294901760
    %624 = vmatpush.xpose.msra.mxu0 %v623
    %v625 = vand.u32 %v468, 4294901760
    %626 = vmatpush.xpose.msra.mxu0 %v625
    %v627 = vand.u32 %v465, 4294901760
    %628 = vmatpush.xpose.msra.mxu0 %v627
    %v629 = vand.u32 %v462, 4294901760
    %630 = vmatpush.xpose.msra.mxu0 %v629
    %v631 = vand.u32 %v459, 4294901760
    %632 = vmatpush.xpose.msra.mxu0 %v631
    %v633 = vand.u32 %v456, 4294901760
    %634 = vmatpush.xpose.msra.mxu0 %v633
    %v635 = vand.u32 %v453, 4294901760
    %v636 = vsub.f32 %v453, %v635
    %v637 = vand.u32 %v636, 4294901760
    %638 = vmatmul.f32.gmra.mxu0 %v637
    %v639 = vpop.f32.mrf.mxu0
    %v640 = vadd.f32 %v609, %v639
    %641 = vdwg.mxu0
    %642 = vmatpush.xpose.msra.mxu0 0.0
    %643 = vmatpush.xpose.msra.mxu0 0.0
    %644 = vmatpush.xpose.msra.mxu0 0.0
    %645 = vmatpush.xpose.msra.mxu0 0.0
    %646 = vmatpush.xpose.msra.mxu0 0.0
    %647 = vmatpush.xpose.msra.mxu0 0.0
    %648 = vmatpush.xpose.msra.mxu0 0.0
    %649 = vmatpush.xpose.msra.mxu0 0.0
    %v650 = vand.u32 %v477, 4294901760
    %v651 = vsub.f32 %v477, %v650
    %v652 = vand.u32 %v651, 4294901760
    %653 = vmatpush.xpose.msra.mxu0 %v652
    %v654 = vand.u32 %v474, 4294901760
    %v655 = vsub.f32 %v474, %v654
    %v656 = vand.u32 %v655, 4294901760
    %657 = vmatpush.xpose.msra.mxu0 %v656
    %v658 = vand.u32 %v471, 4294901760
    %v659 = vsub.f32 %v471, %v658
    %v660 = vand.u32 %v659, 4294901760
    %661 = vmatpush.xpose.msra.mxu0 %v660
    %v662 = vand.u32 %v468, 4294901760
    %v663 = vsub.f32 %v468, %v662
    %v664 = vand.u32 %v663, 4294901760
    %665 = vmatpush.xpose.msra.mxu0 %v664
    %v666 = vand.u32 %v465, 4294901760
    %v667 = vsub.f32 %v465, %v666
    %v668 = vand.u32 %v667, 4294901760
    %669 = vmatpush.xpose.msra.mxu0 %v668
    %v670 = vand.u32 %v462, 4294901760
    %v671 = vsub.f32 %v462, %v670
    %v672 = vand.u32 %v671, 4294901760
    %673 = vmatpush.xpose.msra.mxu0 %v672
    %v674 = vand.u32 %v459, 4294901760
    %v675 = vsub.f32 %v459, %v674
    %v676 = vand.u32 %v675, 4294901760
    %677 = vmatpush.xpose.msra.mxu0 %v676
    %v678 = vand.u32 %v456, 4294901760
    %v679 = vsub.f32 %v456, %v678
    %v680 = vand.u32 %v679, 4294901760
    %681 = vmatpush.xpose.msra.mxu0 %v680
    %v682 = vand.u32 %v453, 4294901760
    %683 = vmatmul.f32.gmra.mxu0 %v682
    %v684 = vpop.f32.mrf.mxu0
    %v685 = vadd.f32 %v640, %v684
    %686 = vdwg.mxu0
    %687 = vmatpush.xpose.msra.mxu0 0.0
    %688 = vmatpush.xpose.msra.mxu0 0.0
    %689 = vmatpush.xpose.msra.mxu0 0.0
    %690 = vmatpush.xpose.msra.mxu0 0.0
    %691 = vmatpush.xpose.msra.mxu0 0.0
    %692 = vmatpush.xpose.msra.mxu0 0.0
    %693 = vmatpush.xpose.msra.mxu0 0.0
    %694 = vmatpush.xpose.msra.mxu0 0.0
    %v695 = vand.u32 %v477, 4294901760
    %696 = vmatpush.xpose.msra.mxu0 %v695
    %v697 = vand.u32 %v474, 4294901760
    %698 = vmatpush.xpose.msra.mxu0 %v697
    %v699 = vand.u32 %v471, 4294901760
    %700 = vmatpush.xpose.msra.mxu0 %v699
    %v701 = vand.u32 %v468, 4294901760
    %702 = vmatpush.xpose.msra.mxu0 %v701
    %v703 = vand.u32 %v465, 4294901760
    %704 = vmatpush.xpose.msra.mxu0 %v703
    %v705 = vand.u32 %v462, 4294901760
    %706 = vmatpush.xpose.msra.mxu0 %v705
    %v707 = vand.u32 %v459, 4294901760
    %708 = vmatpush.xpose.msra.mxu0 %v707
    %v709 = vand.u32 %v456, 4294901760
    %710 = vmatpush.xpose.msra.mxu0 %v709
    %v711 = vand.u32 %v453, 4294901760
    %712 = vmatmul.f32.gmra.mxu0 %v711
    %v713 = vpop.f32.mrf.mxu0
    %v714 = vadd.f32 %v685, %v713
    %715 = vdwg.mxu0
    %716 = vst.msk [vmem:[#allocation4] sm:$0xf] %vm441, %v714
    %v717 = vld [vmem:[%s3] sm:$0xf]
    %v719 = vsel %vm451, %v717, 0
    %721 = vmatpush.xpose.msra.mxu0 0.0
    %722 = vmatpush.xpose.msra.mxu0 0.0
    %723 = vmatpush.xpose.msra.mxu0 0.0
    %724 = vmatpush.xpose.msra.mxu0 0.0
    %725 = vmatpush.xpose.msra.mxu0 0.0
    %726 = vmatpush.xpose.msra.mxu0 0.0
    %727 = vmatpush.xpose.msra.mxu0 0.0
    %728 = vmatpush.xpose.msra.mxu0 0.0
    %v729 = vand.u32 %v477, 4294901760
    %730 = vmatpush.xpose.msra.mxu0 %v729
    %v731 = vand.u32 %v474, 4294901760
    %732 = vmatpush.xpose.msra.mxu0 %v731
    %v733 = vand.u32 %v471, 4294901760
    %734 = vmatpush.xpose.msra.mxu0 %v733
    %v735 = vand.u32 %v468, 4294901760
    %736 = vmatpush.xpose.msra.mxu0 %v735
    %v737 = vand.u32 %v465, 4294901760
    %738 = vmatpush.xpose.msra.mxu0 %v737
    %v739 = vand.u32 %v462, 4294901760
    %740 = vmatpush.xpose.msra.mxu0 %v739
    %v741 = vand.u32 %v459, 4294901760
    %742 = vmatpush.xpose.msra.mxu0 %v741
    %v743 = vand.u32 %v456, 4294901760
    %744 = vmatpush.xpose.msra.mxu0 %v743
    %v745 = vand.u32 %v719, 4294901760
    %v746 = vsub.f32 %v719, %v745
    %v747 = vand.u32 %v746, 4294901760
    %v748 = vsub.f32 %v746, %v747
    %v749 = vand.u32 %v748, 4294901760
    %750 = vmatmul.f32.gmra.mxu0 %v749
    %v751 = vpop.f32.mrf.mxu0
    %v752 = vadd.f32 0.0, %v751
    %753 = vdwg.mxu0
    %754 = vmatpush.xpose.msra.mxu0 0.0
    %755 = vmatpush.xpose.msra.mxu0 0.0
    %756 = vmatpush.xpose.msra.mxu0 0.0
    %757 = vmatpush.xpose.msra.mxu0 0.0
    %758 = vmatpush.xpose.msra.mxu0 0.0
    %759 = vmatpush.xpose.msra.mxu0 0.0
    %760 = vmatpush.xpose.msra.mxu0 0.0
    %761 = vmatpush.xpose.msra.mxu0 0.0
    %v762 = vand.u32 %v477, 4294901760
    %v763 = vsub.f32 %v477, %v762
    %v764 = vand.u32 %v763, 4294901760
    %v765 = vsub.f32 %v763, %v764
    %v766 = vand.u32 %v765, 4294901760
    %767 = vmatpush.xpose.msra.mxu0 %v766
    %v768 = vand.u32 %v474, 4294901760
    %v769 = vsub.f32 %v474, %v768
    %v770 = vand.u32 %v769, 4294901760
    %v771 = vsub.f32 %v769, %v770
    %v772 = vand.u32 %v771, 4294901760
    %773 = vmatpush.xpose.msra.mxu0 %v772
    %v774 = vand.u32 %v471, 4294901760
    %v775 = vsub.f32 %v471, %v774
    %v776 = vand.u32 %v775, 4294901760
    %v777 = vsub.f32 %v775, %v776
    %v778 = vand.u32 %v777, 4294901760
    %779 = vmatpush.xpose.msra.mxu0 %v778
    %v780 = vand.u32 %v468, 4294901760
    %v781 = vsub.f32 %v468, %v780
    %v782 = vand.u32 %v781, 4294901760
    %v783 = vsub.f32 %v781, %v782
    %v784 = vand.u32 %v783, 4294901760
    %785 = vmatpush.xpose.msra.mxu0 %v784
    %v786 = vand.u32 %v465, 4294901760
    %v787 = vsub.f32 %v465, %v786
    %v788 = vand.u32 %v787, 4294901760
    %v789 = vsub.f32 %v787, %v788
    %v790 = vand.u32 %v789, 4294901760
    %791 = vmatpush.xpose.msra.mxu0 %v790
    %v792 = vand.u32 %v462, 4294901760
    %v793 = vsub.f32 %v462, %v792
    %v794 = vand.u32 %v793, 4294901760
    %v795 = vsub.f32 %v793, %v794
    %v796 = vand.u32 %v795, 4294901760
    %797 = vmatpush.xpose.msra.mxu0 %v796
    %v798 = vand.u32 %v459, 4294901760
    %v799 = vsub.f32 %v459, %v798
    %v800 = vand.u32 %v799, 4294901760
    %v801 = vsub.f32 %v799, %v800
    %v802 = vand.u32 %v801, 4294901760
    %803 = vmatpush.xpose.msra.mxu0 %v802
    %v804 = vand.u32 %v456, 4294901760
    %v805 = vsub.f32 %v456, %v804
    %v806 = vand.u32 %v805, 4294901760
    %v807 = vsub.f32 %v805, %v806
    %v808 = vand.u32 %v807, 4294901760
    %809 = vmatpush.xpose.msra.mxu0 %v808
    %v810 = vand.u32 %v719, 4294901760
    %811 = vmatmul.f32.gmra.mxu0 %v810
    %v812 = vpop.f32.mrf.mxu0
    %v813 = vadd.f32 %v752, %v812
    %814 = vdwg.mxu0
    %815 = vmatpush.xpose.msra.mxu0 0.0
    %816 = vmatpush.xpose.msra.mxu0 0.0
    %817 = vmatpush.xpose.msra.mxu0 0.0
    %818 = vmatpush.xpose.msra.mxu0 0.0
    %819 = vmatpush.xpose.msra.mxu0 0.0
    %820 = vmatpush.xpose.msra.mxu0 0.0
    %821 = vmatpush.xpose.msra.mxu0 0.0
    %822 = vmatpush.xpose.msra.mxu0 0.0
    %v823 = vand.u32 %v477, 4294901760
    %v824 = vsub.f32 %v477, %v823
    %825 = vmatpush.xpose.msra.mxu0 %v824
    %v826 = vand.u32 %v474, 4294901760
    %v827 = vsub.f32 %v474, %v826
    %828 = vmatpush.xpose.msra.mxu0 %v827
    %v829 = vand.u32 %v471, 4294901760
    %v830 = vsub.f32 %v471, %v829
    %831 = vmatpush.xpose.msra.mxu0 %v830
    %v832 = vand.u32 %v468, 4294901760
    %v833 = vsub.f32 %v468, %v832
    %834 = vmatpush.xpose.msra.mxu0 %v833
    %v835 = vand.u32 %v465, 4294901760
    %v836 = vsub.f32 %v465, %v835
    %837 = vmatpush.xpose.msra.mxu0 %v836
    %v838 = vand.u32 %v462, 4294901760
    %v839 = vsub.f32 %v462, %v838
    %840 = vmatpush.xpose.msra.mxu0 %v839
    %v841 = vand.u32 %v459, 4294901760
    %v842 = vsub.f32 %v459, %v841
    %843 = vmatpush.xpose.msra.mxu0 %v842
    %v844 = vand.u32 %v456, 4294901760
    %v845 = vsub.f32 %v456, %v844
    %846 = vmatpush.xpose.msra.mxu0 %v845
    %v847 = vand.u32 %v719, 4294901760
    %v848 = vsub.f32 %v719, %v847
    %849 = vmatmul.f32.gmra.mxu0 %v848
    %v850 = vpop.f32.mrf.mxu0
    %v851 = vadd.f32 %v813, %v850
    %852 = vdwg.mxu0
    %853 = vmatpush.xpose.msra.mxu0 0.0
    %854 = vmatpush.xpose.msra.mxu0 0.0
    %855 = vmatpush.xpose.msra.mxu0 0.0
    %856 = vmatpush.xpose.msra.mxu0 0.0
    %857 = vmatpush.xpose.msra.mxu0 0.0
    %858 = vmatpush.xpose.msra.mxu0 0.0
    %859 = vmatpush.xpose.msra.mxu0 0.0
    %860 = vmatpush.xpose.msra.mxu0 0.0
    %v861 = vand.u32 %v477, 4294901760
    %862 = vmatpush.xpose.msra.mxu0 %v861
    %v863 = vand.u32 %v474, 4294901760
    %864 = vmatpush.xpose.msra.mxu0 %v863
    %v865 = vand.u32 %v471, 4294901760
    %866 = vmatpush.xpose.msra.mxu0 %v865
    %v867 = vand.u32 %v468, 4294901760
    %868 = vmatpush.xpose.msra.mxu0 %v867
    %v869 = vand.u32 %v465, 4294901760
    %870 = vmatpush.xpose.msra.mxu0 %v869
    %v871 = vand.u32 %v462, 4294901760
    %872 = vmatpush.xpose.msra.mxu0 %v871
    %v873 = vand.u32 %v459, 4294901760
    %874 = vmatpush.xpose.msra.mxu0 %v873
    %v875 = vand.u32 %v456, 4294901760
    %876 = vmatpush.xpose.msra.mxu0 %v875
    %v877 = vand.u32 %v719, 4294901760
    %v878 = vsub.f32 %v719, %v877
    %v879 = vand.u32 %v878, 4294901760
    %880 = vmatmul.f32.gmra.mxu0 %v879
    %v881 = vpop.f32.mrf.mxu0
    %v882 = vadd.f32 %v851, %v881
    %883 = vdwg.mxu0
    %884 = vmatpush.xpose.msra.mxu0 0.0
    %885 = vmatpush.xpose.msra.mxu0 0.0
    %886 = vmatpush.xpose.msra.mxu0 0.0
    %887 = vmatpush.xpose.msra.mxu0 0.0
    %888 = vmatpush.xpose.msra.mxu0 0.0
    %889 = vmatpush.xpose.msra.mxu0 0.0
    %890 = vmatpush.xpose.msra.mxu0 0.0
    %891 = vmatpush.xpose.msra.mxu0 0.0
    %v892 = vand.u32 %v477, 4294901760
    %v893 = vsub.f32 %v477, %v892
    %v894 = vand.u32 %v893, 4294901760
    %895 = vmatpush.xpose.msra.mxu0 %v894
    %v896 = vand.u32 %v474, 4294901760
    %v897 = vsub.f32 %v474, %v896
    %v898 = vand.u32 %v897, 4294901760
    %899 = vmatpush.xpose.msra.mxu0 %v898
    %v900 = vand.u32 %v471, 4294901760
    %v901 = vsub.f32 %v471, %v900
    %v902 = vand.u32 %v901, 4294901760
    %903 = vmatpush.xpose.msra.mxu0 %v902
    %v904 = vand.u32 %v468, 4294901760
    %v905 = vsub.f32 %v468, %v904
    %v906 = vand.u32 %v905, 4294901760
    %907 = vmatpush.xpose.msra.mxu0 %v906
    %v908 = vand.u32 %v465, 4294901760
    %v909 = vsub.f32 %v465, %v908
    %v910 = vand.u32 %v909, 4294901760
    %911 = vmatpush.xpose.msra.mxu0 %v910
    %v912 = vand.u32 %v462, 4294901760
    %v913 = vsub.f32 %v462, %v912
    %v914 = vand.u32 %v913, 4294901760
    %915 = vmatpush.xpose.msra.mxu0 %v914
    %v916 = vand.u32 %v459, 4294901760
    %v917 = vsub.f32 %v459, %v916
    %v918 = vand.u32 %v917, 4294901760
    %919 = vmatpush.xpose.msra.mxu0 %v918
    %v920 = vand.u32 %v456, 4294901760
    %v921 = vsub.f32 %v456, %v920
    %v922 = vand.u32 %v921, 4294901760
    %923 = vmatpush.xpose.msra.mxu0 %v922
    %v924 = vand.u32 %v719, 4294901760
    %925 = vmatmul.f32.gmra.mxu0 %v924
    %v926 = vpop.f32.mrf.mxu0
    %v927 = vadd.f32 %v882, %v926
    %928 = vdwg.mxu0
    %929 = vmatpush.xpose.msra.mxu0 0.0
    %930 = vmatpush.xpose.msra.mxu0 0.0
    %931 = vmatpush.xpose.msra.mxu0 0.0
    %932 = vmatpush.xpose.msra.mxu0 0.0
    %933 = vmatpush.xpose.msra.mxu0 0.0
    %934 = vmatpush.xpose.msra.mxu0 0.0
    %935 = vmatpush.xpose.msra.mxu0 0.0
    %936 = vmatpush.xpose.msra.mxu0 0.0
    %v937 = vand.u32 %v477, 4294901760
    %938 = vmatpush.xpose.msra.mxu0 %v937
    %v939 = vand.u32 %v474, 4294901760
    %940 = vmatpush.xpose.msra.mxu0 %v939
    %v941 = vand.u32 %v471, 4294901760
    %942 = vmatpush.xpose.msra.mxu0 %v941
    %v943 = vand.u32 %v468, 4294901760
    %944 = vmatpush.xpose.msra.mxu0 %v943
    %v945 = vand.u32 %v465, 4294901760
    %946 = vmatpush.xpose.msra.mxu0 %v945
    %v947 = vand.u32 %v462, 4294901760
    %948 = vmatpush.xpose.msra.mxu0 %v947
    %v949 = vand.u32 %v459, 4294901760
    %950 = vmatpush.xpose.msra.mxu0 %v949
    %v951 = vand.u32 %v456, 4294901760
    %952 = vmatpush.xpose.msra.mxu0 %v951
    %v953 = vand.u32 %v719, 4294901760
    %954 = vmatmul.f32.gmra.mxu0 %v953
    %v955 = vpop.f32.mrf.mxu0
    %v956 = vadd.f32 %v927, %v955
    %957 = vdwg.mxu0
    %958 = vst.msk [vmem:[#allocation6] sm:$0xf] %vm441, %v956
    // Predicated region
    $region18: #{tpu_custom_call.1} parent=1 // pred_check
      _
    $region19: #{tpu_custom_call.1} parent=1 // pred_check_branch
      %960 = sbr.rel (0) target = $region21
    $region20: #{tpu_custom_call.1} parent=1 // pred_region
      %962 = vsyncadd [#allocation3], 0
      %s963 = sshll.u32 [#allocation2], 4
      %s964 = int_to_ptr.vmem [resolvable:$true] %s963
      %s965 = sshll.u32 %s4, 4
      %s966 = int_to_ptr.hbm [resolvable:$true] %s965
      %971 = dma.vmem_to_hbm [thread:$0]  %s964, 512, %s966, [#allocation3], 64, 64, 4
    $region21: #{tpu_custom_call.1} parent=1 // pred_fallthru
      _
    // Predicated region
    $region22: #{tpu_custom_call.1} parent=1 // pred_check
      _
    $region23: #{tpu_custom_call.1} parent=1 // pred_check_branch
      %973 = sbr.rel (0) target = $region25
    $region24: #{tpu_custom_call.1} parent=1 // pred_region
      %975 = vsyncadd [#allocation5], 0
      %s977 = sshll.u32 [#allocation4], 4
      %s978 = int_to_ptr.vmem [resolvable:$true] %s977
      %s979 = sshll.u32 %s5, 4
      %s980 = int_to_ptr.hbm [resolvable:$true] %s979
      %982 = dma.vmem_to_hbm [thread:$0]  %s978, 64, %s980, [#allocation5]
    $region25: #{tpu_custom_call.1} parent=1 // pred_fallthru
      _
    // Predicated region
    $region26: #{tpu_custom_call.1} parent=1 // pred_check
      _
    $region27: #{tpu_custom_call.1} parent=1 // pred_check_branch
      %984 = sbr.rel (0) target = $region29
    $region28: #{tpu_custom_call.1} parent=1 // pred_region
      %986 = vsyncadd [#allocation5], 0
      %s988 = sshll.u32 [#allocation6], 4
      %s989 = int_to_ptr.vmem [resolvable:$true] %s988
      %s990 = sshll.u32 %s6, 4
      %s991 = int_to_ptr.hbm [resolvable:$true] %s990
      %993 = dma.vmem_to_hbm [thread:$0]  %s989, 64, %s991, [#allocation5]
    $region29: #{tpu_custom_call.1} parent=1 // pred_fallthru
      _
    // Predicated region
    $region30: #{tpu_custom_call.1} parent=1 // pred_check
      _
    $region31: #{tpu_custom_call.1} parent=1 // pred_check_branch
      %995 = sbr.rel (0) target = $region33
    $region32: #{tpu_custom_call.1} parent=1 // pred_region
      %997 = dma.done [#allocation3], 512
    $region33: #{tpu_custom_call.1} parent=1 // pred_fallthru
      _
    // Predicated region
    $region34: #{tpu_custom_call.1} parent=1 // pred_check
      _
    $region35: #{tpu_custom_call.1} parent=1 // pred_check_branch
      %999 = sbr.rel (0) target = $region37
    $region36: #{tpu_custom_call.1} parent=1 // pred_region
      %1001 = dma.done [#allocation5], 64
    $region37: #{tpu_custom_call.1} parent=1 // pred_fallthru
      _
    // Predicated region
    $region38: #{tpu_custom_call.1} parent=1 // pred_check
      _
    $region39: #{tpu_custom_call.1} parent=1 // pred_check_branch
      %1003 = sbr.rel (0) target = $region41
    $region40: #{tpu_custom_call.1} parent=1 // pred_region
      %1005 = dma.done [#allocation5], 64
    $region41: #{tpu_custom_call.1} parent=1 // pred_fallthru
      _
    %1006 = vsyncpa [#allocation3], 1
    %1007 = vsyncpa [#allocation5], 1

</llo_original>
